<compile_context>
chip_gen: v6e
topology: v6e:2x2x1
jax: 0.10.0
libtpu: 0.0.40
codegen_flags: <defaults>
</compile_context>

<pallas_src>
import jax
import jax.numpy as jnp
from jax import lax
from jax.experimental import pallas as pl
from jax.experimental.pallas import tpu as pltpu

C_IN = 480    # input / expanded channels
C_SE = 120    # squeezed SE channels
C_OUT = 112   # output channels of final conv
H = W = 14
HW = H * W


def _se_mul_conv_kernel(x_hbm, s_ref, w1_ref, b1_ref, w2_ref, b2_ref, w3_ref,
                        o_ref, x_vmem, dma_sem):
    # Kick off the largest copy (feature map, ~188 KB bf16) immediately so it is
    # hidden under the tiny SE matvec chain + weight-scale fold.
    cp = pltpu.make_async_copy(x_hbm, x_vmem, dma_sem)
    cp.start()

    # --- SE branch, row-vector (lane-dense) orientation --------------------
    # h1 = relu(s @ w1^T + b1) : (1,480) x (120,480)^T -> (1,120)
    h1 = lax.dot_general(s_ref[...], w1_ref[...],
                         (((1,), (1,)), ((), ())),
                         preferred_element_type=jnp.float32) + b1_ref[...]
    h1 = jnp.maximum(h1, 0.0).astype(jnp.bfloat16)
    # h2 = h1 @ w2^T + b2 : (1,120) x (480,120)^T -> (1,480)
    h2 = lax.dot_general(h1, w2_ref[...],
                         (((1,), (1,)), ((), ())),
                         preferred_element_type=jnp.float32) + b2_ref[...]
    # Hardsigmoid in f32: clip(x/6 + 0.5, 0, 1)  (multiply, not divide)
    scale = jnp.clip(h2 * (1.0 / 6.0) + 0.5, 0.0, 1.0)            # (1,480) f32

    # Fold the per-channel scale into the final conv weight: scales 112*480
    # elements (sublane broadcast) instead of the 480*196 feature map, and
    # leaves the x tile untouched on its way into the MXU.
    w3s = w3_ref[...] * scale.astype(jnp.bfloat16)                 # (112,480) bf16

    # --- final bias-free 1x1 conv on the now-resident feature map ----------
    cp.wait()
    o_ref[...] = jnp.dot(w3s, x_vmem[...],
                         preferred_element_type=jnp.float32)       # (112,196) f32


def se_mul_conv(x111, x112, w1, b1, w2, b2, w3):
    """x111: [1,480,14,14], x112: [1,480,1,1]; torch-shaped conv weights."""
    # Channel-major views — all free reshapes (no transposes) since N == 1.
    x2d = x111.reshape(C_IN, HW).astype(jnp.bfloat16)      # (480, 196)
    s2d = x112.reshape(1, C_IN).astype(jnp.bfloat16)       # (1, 480) row vector
    w1m = w1.reshape(C_SE, C_IN).astype(jnp.bfloat16)      # (120, 480)
    w2m = w2.reshape(C_IN, C_SE).astype(jnp.bfloat16)      # (480, 120)
    w3m = w3.reshape(C_OUT, C_IN).astype(jnp.bfloat16)     # (112, 480)
    b1m = b1.reshape(1, C_SE).astype(jnp.float32)          # (1, 120)
    b2m = b2.reshape(1, C_IN).astype(jnp.float32)          # (1, 480)

    vmem = pl.BlockSpec(memory_space=pltpu.MemorySpace.VMEM)
    hbm = pl.BlockSpec(memory_space=pl.ANY)   # raw ref; DMA'd manually in-kernel

    cost = pl.CostEstimate(
        flops=2 * HW * C_IN * C_OUT            # final 1x1 conv
              + 2 * C_IN * C_SE * 2            # two SE matvecs
              + C_OUT * C_IN,                  # weight-scale fold
        transcendentals=0,
        bytes_accessed=2 * (C_IN * HW + C_IN + C_SE * C_IN + C_IN * C_SE
                            + C_OUT * C_IN)    # bf16 operands
                       + 4 * (C_SE + C_IN + C_OUT * HW),   # f32 biases + output
    )

    out2d = pl.pallas_call(
        _se_mul_conv_kernel,
        out_shape=jax.ShapeDtypeStruct((C_OUT, HW), jnp.float32),
        in_specs=[hbm, vmem, vmem, vmem, vmem, vmem, vmem],
        out_specs=vmem,
        scratch_shapes=[pltpu.VMEM((C_IN, HW), jnp.bfloat16),
                        pltpu.SemaphoreType.DMA(())],
        cost_estimate=cost,
    )(x2d, s2d, w1m, b1m, w2m, b2m, w3m)

    # (112, 196) -> NCHW [1, 112, 14, 14] — free reshape.
    return out2d.reshape(1, C_OUT, H, W)


def _reference(x111, x112, w1, b1, w2, b2, w3):
    # pure-JAX f32 reference mirroring the PyTorch forward (for validation)
    s = x112.reshape(1, C_IN)
    h1 = jnp.maximum(s @ w1.reshape(C_SE, C_IN).T + b1, 0.0)
    h2 = h1 @ w2.reshape(C_IN, C_SE).T + b2
    scale = jnp.clip(h2 / 6.0 + 0.5, 0.0, 1.0).reshape(1, C_IN, 1, 1)
    y = x111 * scale
    y2d = jnp.transpose(y.reshape(C_IN, HW), (1, 0))
    o2d = y2d @ w3.reshape(C_OUT, C_IN).T
    return jnp.transpose(o2d, (1, 0)).reshape(1, C_OUT, H, W)


if __name__ == "__main__":
    key = jax.random.PRNGKey(0)
    ks = jax.random.split(key, 7)

    x111 = jax.random.normal(ks[0], (1, C_IN, H, W), dtype=jnp.float32)
    x112 = jax.random.normal(ks[1], (1, C_IN, 1, 1), dtype=jnp.float32)

    # deterministic parameter init (torch Conv2d weight shapes)
    w1 = 0.05 * jax.random.normal(ks[2], (C_SE, C_IN, 1, 1), dtype=jnp.float32)
    b1 = 0.05 * jax.random.normal(ks[3], (C_SE,), dtype=jnp.float32)
    w2 = 0.05 * jax.random.normal(ks[4], (C_IN, C_SE, 1, 1), dtype=jnp.float32)
    b2 = 0.05 * jax.random.normal(ks[5], (C_IN,), dtype=jnp.float32)
    w3 = 0.05 * jax.random.normal(ks[6], (C_OUT, C_IN, 1, 1), dtype=jnp.float32)

    out = se_mul_conv(x111, x112, w1, b1, w2, b2, w3)
    out = jax.block_until_ready(out)

    ref = _reference(x111, x112, w1, b1, w2, b2, w3)
    assert out.shape == (1, C_OUT, H, W)
    # bf16 operands -> relaxed tolerance (accumulation & hardsigmoid stay f32)
    assert jnp.allclose(out, ref, atol=3e-2, rtol=3e-2), (
        float(jnp.max(jnp.abs(out - ref))))

    print("KERNEL_OK")
</pallas_src>

<mosaic_0001>
module attributes {stable_mosaic.version = 11 : i64} {
  func.func @_se_mul_conv_kernel(%arg0: memref<480x196xbf16, #tpu.memory_space<any>>, %arg1: memref<1x480xbf16, #tpu.memory_space<vmem>>, %arg2: memref<120x480xbf16, #tpu.memory_space<vmem>>, %arg3: memref<1x120xf32, #tpu.memory_space<vmem>>, %arg4: memref<480x120xbf16, #tpu.memory_space<vmem>>, %arg5: memref<1x480xf32, #tpu.memory_space<vmem>>, %arg6: memref<112x480xbf16, #tpu.memory_space<vmem>>, %arg7: memref<112x196xf32, #tpu.memory_space<vmem>>, %arg8: memref<480x196xbf16, #tpu.memory_space<vmem>>, %arg9: memref<!tpu.dma_semaphore, #tpu.memory_space<semaphore_mem>>) attributes {dimension_semantics = [], scalar_prefetch = 0 : i64, scratch_operands = 2 : i64, tpu.core_type = #tpu.core_type<tc>} {
    tpu.enqueue_dma source(%arg0 : memref<480x196xbf16, #tpu.memory_space<any>>) target(%arg8 : memref<480x196xbf16, #tpu.memory_space<vmem>>) target_semaphore(%arg9 : memref<!tpu.dma_semaphore, #tpu.memory_space<semaphore_mem>>)
    %c0 = arith.constant 0 : index
    %c0_0 = arith.constant 0 : index
    %0 = vector.load %arg1[%c0, %c0_0] : memref<1x480xbf16, #tpu.memory_space<vmem>>, vector<1x480xbf16>
    %c0_1 = arith.constant 0 : index
    %c0_2 = arith.constant 0 : index
    %1 = vector.load %arg2[%c0_1, %c0_2] : memref<120x480xbf16, #tpu.memory_space<vmem>>, vector<120x480xbf16>
    %cst = arith.constant dense<0.000000e+00> : vector<1x120xf32>
    %2 = tpu.matmul %0, %1, %cst {dimension_numbers = #tpu.dot_dimension_numbers<[1], [1], [0], [0], [0, 0, 1, 0], [], []>} : vector<1x480xbf16>, vector<120x480xbf16>, vector<1x120xf32> -> vector<1x120xf32>
    %c0_3 = arith.constant 0 : index
    %c0_4 = arith.constant 0 : index
    %3 = vector.load %arg3[%c0_3, %c0_4] : memref<1x120xf32, #tpu.memory_space<vmem>>, vector<1x120xf32>
    %4 = arith.addf %2, %3 : vector<1x120xf32>
    %cst_5 = arith.constant 0.000000e+00 : f32
    %5 = vector.broadcast %cst_5 : f32 to vector<1x120xf32>
    %6 = arith.maximumf %4, %5 : vector<1x120xf32>
    %7 = arith.truncf %6 : vector<1x120xf32> to vector<1x120xbf16>
    %c0_6 = arith.constant 0 : index
    %c0_7 = arith.constant 0 : index
    %8 = vector.load %arg4[%c0_6, %c0_7] : memref<480x120xbf16, #tpu.memory_space<vmem>>, vector<480x120xbf16>
    %cst_8 = arith.constant dense<0.000000e+00> : vector<1x480xf32>
    %9 = tpu.matmul %7, %8, %cst_8 {dimension_numbers = #tpu.dot_dimension_numbers<[1], [1], [0], [0], [0, 0, 1, 0], [], []>} : vector<1x120xbf16>, vector<480x120xbf16>, vector<1x480xf32> -> vector<1x480xf32>
    %c0_9 = arith.constant 0 : index
    %c0_10 = arith.constant 0 : index
    %10 = vector.load %arg5[%c0_9, %c0_10] : memref<1x480xf32, #tpu.memory_space<vmem>>, vector<1x480xf32>
    %11 = arith.addf %9, %10 : vector<1x480xf32>
    %cst_11 = arith.constant 0.166666672 : f32
    %12 = vector.broadcast %cst_11 : f32 to vector<1x480xf32>
    %13 = arith.mulf %11, %12 : vector<1x480xf32>
    %cst_12 = arith.constant 5.000000e-01 : f32
    %14 = vector.broadcast %cst_12 : f32 to vector<1x480xf32>
    %15 = arith.addf %13, %14 : vector<1x480xf32>
    %cst_13 = arith.constant 0.000000e+00 : f32
    %cst_14 = arith.constant 1.000000e+00 : f32
    %16 = vector.broadcast %cst_13 : f32 to vector<1x480xf32>
    %17 = arith.maximumf %16, %15 : vector<1x480xf32>
    %18 = vector.broadcast %cst_14 : f32 to vector<1x480xf32>
    %19 = arith.minimumf %18, %17 : vector<1x480xf32>
    %c0_15 = arith.constant 0 : index
    %c0_16 = arith.constant 0 : index
    %20 = vector.load %arg6[%c0_15, %c0_16] : memref<112x480xbf16, #tpu.memory_space<vmem>>, vector<112x480xbf16>
    %21 = arith.truncf %19 : vector<1x480xf32> to vector<1x480xbf16>
    %22 = vector.broadcast %21 : vector<1x480xbf16> to vector<112x480xbf16>
    %23 = arith.mulf %20, %22 : vector<112x480xbf16>
    tpu.wait_dma2 semaphore(%arg9 : memref<!tpu.dma_semaphore, #tpu.memory_space<semaphore_mem>>) src(%arg0 : memref<480x196xbf16, #tpu.memory_space<any>>) dst(%arg8 : memref<480x196xbf16, #tpu.memory_space<vmem>>)
    %c0_17 = arith.constant 0 : index
    %c0_18 = arith.constant 0 : index
    %24 = vector.load %arg8[%c0_17, %c0_18] : memref<480x196xbf16, #tpu.memory_space<vmem>>, vector<480x196xbf16>
    %cst_19 = arith.constant dense<0.000000e+00> : vector<112x196xf32>
    %25 = tpu.matmul %23, %24, %cst_19 {dimension_numbers = #tpu.dot_dimension_numbers<[1], [0], [0], [1], [0, 0, 1, 1], [], []>} : vector<112x480xbf16>, vector<480x196xbf16>, vector<112x196xf32> -> vector<112x196xf32>
    %c0_20 = arith.constant 0 : index
    %c0_21 = arith.constant 0 : index
    %26 = vector.load %arg7[%c0_20, %c0_21] : memref<112x196xf32, #tpu.memory_space<vmem>>, vector<112x196xf32>
    tpu.vector_store %arg7[%c0_20, %c0_21], %25 {strides = array<i32>} : memref<112x196xf32, #tpu.memory_space<vmem>>, vector<112x196xf32>,
    return
  }
}

</mosaic_0001>

<llo_original>
// kernel: tpu_custom_call.1
$region0: #{tpu_custom_call.1}
  #allocation0 [shape = 'u32[]', space=smem, size = 0x4, offset = 0x4, fixed_abs, tag = 'smem constant byte address 0x4 - core index']
  #allocation1 [shape = 'u32[144,128]{1,0:T(1,128)}', space=vmem, size = 0x12000, scoped, tag = 'internal scratch']
  #allocation2 [shape = 'bf16[480,196]{1,0:T(8,128)(2,1)}', space=vmem, size = 0x3c000, scoped, tag = 'scratch operand']
  #allocation3 [shape = 's32[1]{0}', space=sflag, size = 0x4, scoped, tag = 'scratch operand']
  #allocation4 [shape = 's32[]', space=sflag, size = 0x4, offset = 0, fixed_abs, tag = 'sflag constant byte address 0x0 - dummy sync flag']
  %s0 = inlined_call_operand.vmem [shape: bf16[480,196], index: 0, kind: input, shape index: {}]
  %s1 = inlined_call_operand.vmem [shape: bf16[1,480], index: 1, kind: input, shape index: {}]
  %s2 = inlined_call_operand.vmem [shape: bf16[120,480], index: 2, kind: input, shape index: {}]
  %s3 = inlined_call_operand.vmem [shape: f32[1,120], index: 3, kind: input, shape index: {}]
  %s4 = inlined_call_operand.vmem [shape: bf16[480,120], index: 4, kind: input, shape index: {}]
  %s5 = inlined_call_operand.vmem [shape: f32[1,480], index: 5, kind: input, shape index: {}]
  %s6 = inlined_call_operand.vmem [shape: bf16[112,480], index: 6, kind: input, shape index: {}]
  %s7 = inlined_call_operand.vmem [shape: f32[112,196], index: 7, kind: output, shape index: {}]
  %s8 = sld [smem:[#allocation0]]
  $region68: #{tpu_custom_call.1} parent=0
    _
  %s10 = ssub.s32 1, %s8
  %s11 = scalar_select 0, %s10, %s8
  // Predicated region
  $region2: #{tpu_custom_call.1} parent=0 // pred_check
    _
  $region3: #{tpu_custom_call.1} parent=0 // pred_check_branch
    %13 = sbr.rel (0) target = $region5
  $region4: #{tpu_custom_call.1} parent=0 // pred_region
    _
  $region5: #{tpu_custom_call.1} parent=0 // pred_fallthru
    _
  // Predicated region
  $region6: #{tpu_custom_call.1} parent=0 // pred_check
    _
  $region7: #{tpu_custom_call.1} parent=0 // pred_check_branch
    %15 = sbr.rel (0) target = $region9
  $region8: #{tpu_custom_call.1} parent=0 // pred_region
    _
  $region9: #{tpu_custom_call.1} parent=0 // pred_fallthru
    _
  // Predicated region
  $region10: #{tpu_custom_call.1} parent=0 // pred_check
    _
  $region11: #{tpu_custom_call.1} parent=0 // pred_check_branch
    %17 = sbr.rel (0) target = $region13
  $region12: #{tpu_custom_call.1} parent=0 // pred_region
    _
  $region13: #{tpu_custom_call.1} parent=0 // pred_fallthru
    _
  // Predicated region
  $region14: #{tpu_custom_call.1} parent=0 // pred_check
    _
  $region15: #{tpu_custom_call.1} parent=0 // pred_check_branch
    %19 = sbr.rel (0) target = $region17
  $region16: #{tpu_custom_call.1} parent=0 // pred_region
    _
  $region17: #{tpu_custom_call.1} parent=0 // pred_fallthru
    _
  // Predicated region
  $region18: #{tpu_custom_call.1} parent=0 // pred_check
    _
  $region19: #{tpu_custom_call.1} parent=0 // pred_check_branch
    %21 = sbr.rel (0) target = $region21
  $region20: #{tpu_custom_call.1} parent=0 // pred_region
    _
  $region21: #{tpu_custom_call.1} parent=0 // pred_fallthru
    _
  // Predicated region
  $region22: #{tpu_custom_call.1} parent=0 // pred_check
    _
  $region23: #{tpu_custom_call.1} parent=0 // pred_check_branch
    %23 = sbr.rel (0) target = $region25
  $region24: #{tpu_custom_call.1} parent=0 // pred_region
    _
  $region25: #{tpu_custom_call.1} parent=0 // pred_fallthru
    _
  %p26 = scmp.lt.u32.totalorder 480, 8
  %p27 = pneg %p26
  // Predicated region
  $region26: #{tpu_custom_call.1} parent=0 // pred_check
    _
  $region27: #{tpu_custom_call.1} parent=0 // pred_check_branch
    %29 = sbr.rel (%p26) target = $region29
  $region28: #{tpu_custom_call.1} parent=0 // pred_region
    %s45 = sand.u32 480, 7
    %p46 = scmp.eq.s32.totalorder %s45, 0
    // Predicated region
    $region41: #{tpu_custom_call.1} parent=28 // pred_check
      %p47 = pneg %p46
    $region42: #{tpu_custom_call.1} parent=28 // pred_check_branch
      %49 = sbr.rel (%p47) target = $region44
    $region43: #{tpu_custom_call.1} parent=28 // pred_region
      loop: start=0, step=1, limit=1
      $region45: #{tpu_custom_call.1} parent=43 // loop_pre_header
        _
      $region46: #{tpu_custom_call.1} parent=43 // loop_header
        %s51 = sphi 0, %s55
        %p52 = scmp.ge.s32.totalorder %s51, 1
        %s56 = sphi %s0, %s0
        %s57 = sphi [#allocation2], [#allocation2]
      $region47: #{tpu_custom_call.1} parent=43 // loop_header_branch
        %54 = sbr.rel (%p52) target = $region51
      $region48: #{tpu_custom_call.1} parent=43 // loop_body
        %v58 = vld [vmem:[%s56] sm:$0xff]
        %59 = vst [vmem:[%s57] sm:$0xff] %v58
        %v60 = vld [vmem:[%s56 + $0x8] sm:$0xff]
        %61 = vst [vmem:[%s57 + $0x8] sm:$0xff] %v60
        %v62 = vld [vmem:[%s56 + $0x10] sm:$0xff]
        %63 = vst [vmem:[%s57 + $0x10] sm:$0xff] %v62
        %v64 = vld [vmem:[%s56 + $0x18] sm:$0xff]
        %65 = vst [vmem:[%s57 + $0x18] sm:$0xff] %v64
        %v66 = vld [vmem:[%s56 + $0x20] sm:$0xff]
        %67 = vst [vmem:[%s57 + $0x20] sm:$0xff] %v66
        %v68 = vld [vmem:[%s56 + $0x28] sm:$0xff]
        %69 = vst [vmem:[%s57 + $0x28] sm:$0xff] %v68
        %v70 = vld [vmem:[%s56 + $0x30] sm:$0xff]
        %71 = vst [vmem:[%s57 + $0x30] sm:$0xff] %v70
        %v72 = vld [vmem:[%s56 + $0x38] sm:$0xff]
        %73 = vst [vmem:[%s57 + $0x38] sm:$0xff] %v72
        %v74 = vld [vmem:[%s56 + $0x40] sm:$0xff]
        %75 = vst [vmem:[%s57 + $0x40] sm:$0xff] %v74
        %v76 = vld [vmem:[%s56 + $0x48] sm:$0xff]
        %77 = vst [vmem:[%s57 + $0x48] sm:$0xff] %v76
        %v78 = vld [vmem:[%s56 + $0x50] sm:$0xff]
        %79 = vst [vmem:[%s57 + $0x50] sm:$0xff] %v78
        %v80 = vld [vmem:[%s56 + $0x58] sm:$0xff]
        %81 = vst [vmem:[%s57 + $0x58] sm:$0xff] %v80
        %v82 = vld [vmem:[%s56 + $0x60] sm:$0xff]
        %83 = vst [vmem:[%s57 + $0x60] sm:$0xff] %v82
        %v84 = vld [vmem:[%s56 + $0x68] sm:$0xff]
        %85 = vst [vmem:[%s57 + $0x68] sm:$0xff] %v84
        %v86 = vld [vmem:[%s56 + $0x70] sm:$0xff]
        %87 = vst [vmem:[%s57 + $0x70] sm:$0xff] %v86
        %v88 = vld [vmem:[%s56 + $0x78] sm:$0xff]
        %89 = vst [vmem:[%s57 + $0x78] sm:$0xff] %v88
        %v90 = vld [vmem:[%s56 + $0x80] sm:$0xff]
        %91 = vst [vmem:[%s57 + $0x80] sm:$0xff] %v90
        %v92 = vld [vmem:[%s56 + $0x88] sm:$0xff]
        %93 = vst [vmem:[%s57 + $0x88] sm:$0xff] %v92
        %v94 = vld [vmem:[%s56 + $0x90] sm:$0xff]
        %95 = vst [vmem:[%s57 + $0x90] sm:$0xff] %v94
        %v96 = vld [vmem:[%s56 + $0x98] sm:$0xff]
        %97 = vst [vmem:[%s57 + $0x98] sm:$0xff] %v96
        %v98 = vld [vmem:[%s56 + $0xa0] sm:$0xff]
        %99 = vst [vmem:[%s57 + $0xa0] sm:$0xff] %v98
        %v100 = vld [vmem:[%s56 + $0xa8] sm:$0xff]
        %101 = vst [vmem:[%s57 + $0xa8] sm:$0xff] %v100
        %v102 = vld [vmem:[%s56 + $0xb0] sm:$0xff]
        %103 = vst [vmem:[%s57 + $0xb0] sm:$0xff] %v102
        %v104 = vld [vmem:[%s56 + $0xb8] sm:$0xff]
        %105 = vst [vmem:[%s57 + $0xb8] sm:$0xff] %v104
        %v106 = vld [vmem:[%s56 + $0xc0] sm:$0xff]
        %107 = vst [vmem:[%s57 + $0xc0] sm:$0xff] %v106
        %v108 = vld [vmem:[%s56 + $0xc8] sm:$0xff]
        %109 = vst [vmem:[%s57 + $0xc8] sm:$0xff] %v108
        %v110 = vld [vmem:[%s56 + $0xd0] sm:$0xff]
        %111 = vst [vmem:[%s57 + $0xd0] sm:$0xff] %v110
        %v112 = vld [vmem:[%s56 + $0xd8] sm:$0xff]
        %113 = vst [vmem:[%s57 + $0xd8] sm:$0xff] %v112
        %v114 = vld [vmem:[%s56 + $0xe0] sm:$0xff]
        %115 = vst [vmem:[%s57 + $0xe0] sm:$0xff] %v114
        %v116 = vld [vmem:[%s56 + $0xe8] sm:$0xff]
        %117 = vst [vmem:[%s57 + $0xe8] sm:$0xff] %v116
        %v118 = vld [vmem:[%s56 + $0xf0] sm:$0xff]
        %119 = vst [vmem:[%s57 + $0xf0] sm:$0xff] %v118
        %v120 = vld [vmem:[%s56 + $0xf8] sm:$0xff]
        %121 = vst [vmem:[%s57 + $0xf8] sm:$0xff] %v120
        %v122 = vld [vmem:[%s56 + $0x100] sm:$0xff]
        %123 = vst [vmem:[%s57 + $0x100] sm:$0xff] %v122
        %v124 = vld [vmem:[%s56 + $0x108] sm:$0xff]
        %125 = vst [vmem:[%s57 + $0x108] sm:$0xff] %v124
        %v126 = vld [vmem:[%s56 + $0x110] sm:$0xff]
        %127 = vst [vmem:[%s57 + $0x110] sm:$0xff] %v126
        %v128 = vld [vmem:[%s56 + $0x118] sm:$0xff]
        %129 = vst [vmem:[%s57 + $0x118] sm:$0xff] %v128
        %v130 = vld [vmem:[%s56 + $0x120] sm:$0xff]
        %131 = vst [vmem:[%s57 + $0x120] sm:$0xff] %v130
        %v132 = vld [vmem:[%s56 + $0x128] sm:$0xff]
        %133 = vst [vmem:[%s57 + $0x128] sm:$0xff] %v132
        %v134 = vld [vmem:[%s56 + $0x130] sm:$0xff]
        %135 = vst [vmem:[%s57 + $0x130] sm:$0xff] %v134
        %v136 = vld [vmem:[%s56 + $0x138] sm:$0xff]
        %137 = vst [vmem:[%s57 + $0x138] sm:$0xff] %v136
        %v138 = vld [vmem:[%s56 + $0x140] sm:$0xff]
        %139 = vst [vmem:[%s57 + $0x140] sm:$0xff] %v138
        %v140 = vld [vmem:[%s56 + $0x148] sm:$0xff]
        %141 = vst [vmem:[%s57 + $0x148] sm:$0xff] %v140
        %v142 = vld [vmem:[%s56 + $0x150] sm:$0xff]
        %143 = vst [vmem:[%s57 + $0x150] sm:$0xff] %v142
        %v144 = vld [vmem:[%s56 + $0x158] sm:$0xff]
        %145 = vst [vmem:[%s57 + $0x158] sm:$0xff] %v144
        %v146 = vld [vmem:[%s56 + $0x160] sm:$0xff]
        %147 = vst [vmem:[%s57 + $0x160] sm:$0xff] %v146
        %v148 = vld [vmem:[%s56 + $0x168] sm:$0xff]
        %149 = vst [vmem:[%s57 + $0x168] sm:$0xff] %v148
        %v150 = vld [vmem:[%s56 + $0x170] sm:$0xff]
        %151 = vst [vmem:[%s57 + $0x170] sm:$0xff] %v150
        %v152 = vld [vmem:[%s56 + $0x178] sm:$0xff]
        %153 = vst [vmem:[%s57 + $0x178] sm:$0xff] %v152
        %v154 = vld [vmem:[%s56 + $0x180] sm:$0xff]
        %155 = vst [vmem:[%s57 + $0x180] sm:$0xff] %v154
        %v156 = vld [vmem:[%s56 + $0x188] sm:$0xff]
        %157 = vst [vmem:[%s57 + $0x188] sm:$0xff] %v156
        %v158 = vld [vmem:[%s56 + $0x190] sm:$0xff]
        %159 = vst [vmem:[%s57 + $0x190] sm:$0xff] %v158
        %v160 = vld [vmem:[%s56 + $0x198] sm:$0xff]
        %161 = vst [vmem:[%s57 + $0x198] sm:$0xff] %v160
        %v162 = vld [vmem:[%s56 + $0x1a0] sm:$0xff]
        %163 = vst [vmem:[%s57 + $0x1a0] sm:$0xff] %v162
        %v164 = vld [vmem:[%s56 + $0x1a8] sm:$0xff]
        %165 = vst [vmem:[%s57 + $0x1a8] sm:$0xff] %v164
        %v166 = vld [vmem:[%s56 + $0x1b0] sm:$0xff]
        %167 = vst [vmem:[%s57 + $0x1b0] sm:$0xff] %v166
        %v168 = vld [vmem:[%s56 + $0x1b8] sm:$0xff]
        %169 = vst [vmem:[%s57 + $0x1b8] sm:$0xff] %v168
        %v170 = vld [vmem:[%s56 + $0x1c0] sm:$0xff]
        %171 = vst [vmem:[%s57 + $0x1c0] sm:$0xff] %v170
        %v172 = vld [vmem:[%s56 + $0x1c8] sm:$0xff]
        %173 = vst [vmem:[%s57 + $0x1c8] sm:$0xff] %v172
        %v174 = vld [vmem:[%s56 + $0x1d0] sm:$0xff]
        %175 = vst [vmem:[%s57 + $0x1d0] sm:$0xff] %v174
        %v176 = vld [vmem:[%s56 + $0x1d8] sm:$0xff]
        %177 = vst [vmem:[%s57 + $0x1d8] sm:$0xff] %v176
      $region49: #{tpu_custom_call.1} parent=43 // loop_footer
        %s55 = sadd.s32 1, %s51
      $region50: #{tpu_custom_call.1} parent=43 // loop_footer_branch
        %50 = sbr.rel target = $region46
      $region51: #{tpu_custom_call.1} parent=43 // loop_exit
        _
    $region44: #{tpu_custom_call.1} parent=28 // pred_fallthru
      _
    %p178 = pneg %p46
    // Predicated region
    $region52: #{tpu_custom_call.1} parent=28 // pred_check
      _
    $region53: #{tpu_custom_call.1} parent=28 // pred_check_branch
      %180 = sbr.rel (%p46) target = $region55
    $region54: #{tpu_custom_call.1} parent=28 // pred_region
      %s181 = sand.u32 480, 7
    $region55: #{tpu_custom_call.1} parent=28 // pred_fallthru
      _
  $region29: #{tpu_custom_call.1} parent=0 // pred_fallthru
    _
  // Predicated region
  $region30: #{tpu_custom_call.1} parent=0 // pred_check
    %p30 = pneg %p26
  $region31: #{tpu_custom_call.1} parent=0 // pred_check_branch
    %32 = sbr.rel (%p30) target = $region33
  $region32: #{tpu_custom_call.1} parent=0 // pred_region
    %s33 = sshll.u32 1, 480
    %s34 = ssub.s32 %s33, 1
    loop: start=0, step=1, limit=1
    $region34: #{tpu_custom_call.1} parent=32 // loop_pre_header
      _
    $region35: #{tpu_custom_call.1} parent=32 // loop_header
      %s36 = sphi 0, %s40
      %p37 = scmp.ge.s32.totalorder %s36, 1
      %s41 = sphi %s0, %s0
      %s42 = sphi [#allocation2], [#allocation2]
    $region36: #{tpu_custom_call.1} parent=32 // loop_header_branch
      %39 = sbr.rel (%p37) target = $region40
    $region37: #{tpu_custom_call.1} parent=32 // loop_body
      %v43 = vld [vmem:[%s41] sm:%s34]
      %44 = vst [vmem:[%s42] sm:%s34] %v43
    $region38: #{tpu_custom_call.1} parent=32 // loop_footer
      %s40 = sadd.s32 1, %s36
    $region39: #{tpu_custom_call.1} parent=32 // loop_footer_branch
      %35 = sbr.rel target = $region35
    $region40: #{tpu_custom_call.1} parent=32 // loop_exit
      _
  $region33: #{tpu_custom_call.1} parent=0 // pred_fallthru
    _
  // Predicated region
  $region56: #{tpu_custom_call.1} parent=0 // pred_check
    _
  $region57: #{tpu_custom_call.1} parent=0 // pred_check_branch
    %184 = sbr.rel (0) target = $region59
  $region58: #{tpu_custom_call.1} parent=0 // pred_region
    %185 = vsyncadd [#allocation3], 7680
  $region59: #{tpu_custom_call.1} parent=0 // pred_fallthru
    _
  %v186 = vld [vmem:[%s1] sm:$0xf]
  %v187 = vld [vmem:[%s2] sm:$0xff]
  %v188 = vld [vmem:[%s2 + $0x8] sm:$0xff]
  %v189 = vld [vmem:[%s2 + $0x10] sm:$0xff]
  %v190 = vld [vmem:[%s2 + $0x18] sm:$0xff]
  %v191 = vld [vmem:[%s2 + $0x20] sm:$0xff]
  %v192 = vld [vmem:[%s2 + $0x28] sm:$0xff]
  %v193 = vld [vmem:[%s2 + $0x30] sm:$0xff]
  %v194 = vld [vmem:[%s2 + $0x38] sm:$0xff]
  %v195 = vld [vmem:[%s2 + $0x40] sm:$0xff]
  %v196 = vld [vmem:[%s2 + $0x48] sm:$0xff]
  %v197 = vld [vmem:[%s2 + $0x50] sm:$0xff]
  %v198 = vld [vmem:[%s2 + $0x58] sm:$0xff]
  %v199 = vld [vmem:[%s2 + $0x60] sm:$0xff]
  %v200 = vld [vmem:[%s2 + $0x68] sm:$0xff]
  %v201 = vld [vmem:[%s2 + $0x70] sm:$0xff]
  %v202 = vld [vmem:[%s2 + $0x78] sm:$0xff]
  %v203 = vld [vmem:[%s2 + $0x80] sm:$0xff]
  %v204 = vld [vmem:[%s2 + $0x88] sm:$0xff]
  %v205 = vld [vmem:[%s2 + $0x90] sm:$0xff]
  %v206 = vld [vmem:[%s2 + $0x98] sm:$0xff]
  %v207 = vld [vmem:[%s2 + $0xa0] sm:$0xff]
  %v208 = vld [vmem:[%s2 + $0xa8] sm:$0xff]
  %v209 = vld [vmem:[%s2 + $0xb0] sm:$0xff]
  %v210 = vld [vmem:[%s2 + $0xb8] sm:$0xff]
  %v211 = vld [vmem:[%s2 + $0xc0] sm:$0xff]
  %v212 = vld [vmem:[%s2 + $0xc8] sm:$0xff]
  %v213 = vld [vmem:[%s2 + $0xd0] sm:$0xff]
  %v214 = vld [vmem:[%s2 + $0xd8] sm:$0xff]
  %v215 = vld [vmem:[%s2 + $0xe0] sm:$0xff]
  %v216 = vld [vmem:[%s2 + $0xe8] sm:$0xff]
  %v217 = vld [vmem:[%s3] sm:$0x1]
  %v220 = vunpack.c.l.s4 1966171168
  %v221 = vunpack.c.0.s8 %v220
  %v222 = vlaneseq
  %v223 = vshrl.u32 %v222, 7
  %v224 = vsub.s32 %v221, %v223
  %v225 = vrot.slane %v186, %v224
  %v226 = vcombine.high %v225, %v225
  %v228 = vunpack.c.l.s4 1966171168
  %v229 = vunpack.c.0.s8 %v228
  %v230 = vlaneseq
  %v231 = vshrl.u32 %v230, 7
  %v232 = vsub.s32 %v229, %v231
  %v233 = vrot.slane %v225, %v232
  %v235 = vunpack.c.l.s4 1966171168
  %v236 = vunpack.c.0.s8 %v235
  %v237 = vlaneseq
  %v238 = vshrl.u32 %v237, 7
  %v239 = vsub.s32 %v236, %v238
  %v240 = vrot.slane %v226, %v239
  %v241 = vcombine.high %v233, %v233
  %v242 = vcombine.high %v240, %v240
  %v276 = vunpack.c.l.b16 %v187
  %v277 = vunpack.c.h.b16 %v187
  %v278 = vunpack.c.l.b16 %v188
  %v279 = vunpack.c.h.b16 %v188
  %v280 = vunpack.c.l.b16 %v189
  %v281 = vunpack.c.h.b16 %v189
  %v282 = vunpack.c.l.b16 %v190
  %v283 = vunpack.c.h.b16 %v190
  %v284 = vunpack.c.l.b16 %v191
  %v285 = vunpack.c.h.b16 %v191
  %v286 = vunpack.c.l.b16 %v192
  %v287 = vunpack.c.h.b16 %v192
  %v288 = vunpack.c.l.b16 %v193
  %v289 = vunpack.c.h.b16 %v193
  %v290 = vunpack.c.l.b16 %v194
  %v291 = vunpack.c.h.b16 %v194
  %v292 = vunpack.c.l.b16 %v195
  %v293 = vunpack.c.h.b16 %v195
  %v294 = vunpack.c.l.b16 %v196
  %v295 = vunpack.c.h.b16 %v196
  %v296 = vunpack.c.l.b16 %v197
  %v297 = vunpack.c.h.b16 %v197
  %v298 = vunpack.c.l.b16 %v198
  %v299 = vunpack.c.h.b16 %v198
  %v300 = vunpack.c.l.b16 %v199
  %v301 = vunpack.c.h.b16 %v199
  %v302 = vunpack.c.l.b16 %v200
  %v303 = vunpack.c.h.b16 %v200
  %v304 = vunpack.c.l.b16 %v201
  %v305 = vunpack.c.h.b16 %v201
  %v306 = vunpack.c.l.b16 %v202
  %v307 = vunpack.c.h.b16 %v202
  %v308 = vunpack.c.l.b16 %v203
  %v309 = vunpack.c.h.b16 %v203
  %v310 = vunpack.c.l.b16 %v204
  %v311 = vunpack.c.h.b16 %v204
  %v312 = vunpack.c.l.b16 %v205
  %v313 = vunpack.c.h.b16 %v205
  %v314 = vunpack.c.l.b16 %v206
  %v315 = vunpack.c.h.b16 %v206
  %v316 = vunpack.c.l.b16 %v207
  %v317 = vunpack.c.h.b16 %v207
  %v318 = vunpack.c.l.b16 %v208
  %v319 = vunpack.c.h.b16 %v208
  %v320 = vunpack.c.l.b16 %v209
  %v321 = vunpack.c.h.b16 %v209
  %v322 = vunpack.c.l.b16 %v210
  %v323 = vunpack.c.h.b16 %v210
  %v324 = vunpack.c.l.b16 %v211
  %v325 = vunpack.c.h.b16 %v211
  %v326 = vunpack.c.l.b16 %v212
  %v327 = vunpack.c.h.b16 %v212
  %v328 = vunpack.c.l.b16 %v213
  %v329 = vunpack.c.h.b16 %v213
  %v330 = vunpack.c.l.b16 %v214
  %v331 = vunpack.c.h.b16 %v214
  %v332 = vunpack.c.l.b16 %v215
  %v333 = vunpack.c.h.b16 %v215
  %v334 = vunpack.c.l.b16 %v216
  %v335 = vunpack.c.h.b16 %v216
  %v336 = vpack.c.b16 %v280, %v276
  %v337 = vpack.c.b16 %v281, %v277
  %v338 = vpack.c.b16 %v282, %v278
  %v339 = vpack.c.b16 %v283, %v279
  %v340 = vpack.c.b16 %v288, %v284
  %v341 = vpack.c.b16 %v289, %v285
  %v342 = vpack.c.b16 %v290, %v286
  %v343 = vpack.c.b16 %v291, %v287
  %v344 = vpack.c.b16 %v296, %v292
  %v345 = vpack.c.b16 %v297, %v293
  %v346 = vpack.c.b16 %v298, %v294
  %v347 = vpack.c.b16 %v299, %v295
  %v348 = vpack.c.b16 %v304, %v300
  %v349 = vpack.c.b16 %v305, %v301
  %v350 = vpack.c.b16 %v306, %v302
  %v351 = vpack.c.b16 %v307, %v303
  %v352 = vpack.c.b16 %v312, %v308
  %v353 = vpack.c.b16 %v313, %v309
  %v354 = vpack.c.b16 %v314, %v310
  %v355 = vpack.c.b16 %v315, %v311
  %v356 = vpack.c.b16 %v320, %v316
  %v357 = vpack.c.b16 %v321, %v317
  %v358 = vpack.c.b16 %v322, %v318
  %v359 = vpack.c.b16 %v323, %v319
  %v360 = vpack.c.b16 %v328, %v324
  %v361 = vpack.c.b16 %v329, %v325
  %v362 = vpack.c.b16 %v330, %v326
  %v363 = vpack.c.b16 %v331, %v327
  %v364 = vpack.c.b16 %v332, %v332
  %v365 = vpack.c.b16 %v333, %v333
  %v366 = vpack.c.b16 %v334, %v334
  %v367 = vpack.c.b16 %v335, %v335
  %vm392 = vcmask 785408
  %v394 = vsel %vm392, %v242, 0
  %v397 = vsel %vm392, %v339, 0
  %v400 = vsel %vm392, %v343, 0
  %v403 = vsel %vm392, %v347, 0
  %v406 = vsel %vm392, %v351, 0
  %v409 = vsel %vm392, %v355, 0
  %v412 = vsel %vm392, %v359, 0
  %v415 = vsel %vm392, %v363, 0
  %v418 = vsel %vm392, %v367, 0
  %420 = vmatprep.subr.bf16.mxu0 %v365
  %421 = vmatpush1.bf16.xpose.msra.mxu0 %v364
  %422 = vmatprep.subr.bf16.mxu0 %v361
  %423 = vmatpush1.bf16.xpose.msra.mxu0 %v360
  %424 = vmatprep.subr.bf16.mxu0 %v357
  %425 = vmatpush1.bf16.xpose.msra.mxu0 %v356
  %426 = vmatprep.subr.bf16.mxu0 %v353
  %427 = vmatpush1.bf16.xpose.msra.mxu0 %v352
  %428 = vmatprep.subr.bf16.mxu0 %v349
  %429 = vmatpush1.bf16.xpose.msra.mxu0 %v348
  %430 = vmatprep.subr.bf16.mxu0 %v345
  %431 = vmatpush1.bf16.xpose.msra.mxu0 %v344
  %432 = vmatprep.subr.bf16.mxu0 %v341
  %433 = vmatpush1.bf16.xpose.msra.mxu0 %v340
  %434 = vmatprep.subr.bf16.mxu0 %v337
  %435 = vmatpush1.bf16.xpose.msra.mxu0 %v336
  %436 = vmatprep.subr.bf16.mxu0 0
  %437 = vmatpush2.bf16.xpose.msra.mxu0 0
  %438 = vmatprep.subr.bf16.mxu0 0
  %439 = vmatpush2.bf16.xpose.msra.mxu0 0
  %440 = vmatprep.subr.bf16.mxu0 0
  %441 = vmatpush2.bf16.xpose.msra.mxu0 0
  %442 = vmatprep.subr.bf16.mxu0 0
  %443 = vmatpush2.bf16.xpose.msra.mxu0 0
  %444 = vmatprep.subr.bf16.mxu0 0
  %445 = vmatpush2.bf16.xpose.msra.mxu0 0
  %446 = vmatprep.subr.bf16.mxu0 0
  %447 = vmatpush2.bf16.xpose.msra.mxu0 0
  %448 = vmatprep.subr.bf16.mxu0 0
  %449 = vmatpush2.bf16.xpose.msra.mxu0 0
  %450 = vmatprep.subr.bf16.mxu0 0
  %451 = vmatpush2.bf16.xpose.msra.mxu0 0
  %452 = vmatprep.mubr.bf16.mxu0 %v240
  %453 = vmatmul.mubr.bf16.gmra.mxu0 %v233
  %v454 = vpop.f32.mrf.mxu0
  %v455 = vadd.f32 %v217, %v454
  %v456 = vpop.f32.mrf.mxu0
  %v457 = vpop.f32.mrf.mxu0
  %v458 = vpop.f32.mrf.mxu0
  %459 = vdwg.mxu0
  %460 = vmatprep.subr.bf16.mxu0 %v418
  %461 = vmatpush1.bf16.xpose.msra.mxu0 %v366
  %462 = vmatprep.subr.bf16.mxu0 %v415
  %463 = vmatpush1.bf16.xpose.msra.mxu0 %v362
  %464 = vmatprep.subr.bf16.mxu0 %v412
  %465 = vmatpush1.bf16.xpose.msra.mxu0 %v358
  %466 = vmatprep.subr.bf16.mxu0 %v409
  %467 = vmatpush1.bf16.xpose.msra.mxu0 %v354
  %468 = vmatprep.subr.bf16.mxu0 %v406
  %469 = vmatpush1.bf16.xpose.msra.mxu0 %v350
  %470 = vmatprep.subr.bf16.mxu0 %v403
  %471 = vmatpush1.bf16.xpose.msra.mxu0 %v346
  %472 = vmatprep.subr.bf16.mxu0 %v400
  %473 = vmatpush1.bf16.xpose.msra.mxu0 %v342
  %474 = vmatprep.subr.bf16.mxu0 %v397
  %475 = vmatpush1.bf16.xpose.msra.mxu0 %v338
  %476 = vmatprep.subr.bf16.mxu0 0
  %477 = vmatpush2.bf16.xpose.msra.mxu0 0
  %478 = vmatprep.subr.bf16.mxu0 0
  %479 = vmatpush2.bf16.xpose.msra.mxu0 0
  %480 = vmatprep.subr.bf16.mxu0 0
  %481 = vmatpush2.bf16.xpose.msra.mxu0 0
  %482 = vmatprep.subr.bf16.mxu0 0
  %483 = vmatpush2.bf16.xpose.msra.mxu0 0
  %484 = vmatprep.subr.bf16.mxu0 0
  %485 = vmatpush2.bf16.xpose.msra.mxu0 0
  %486 = vmatprep.subr.bf16.mxu0 0
  %487 = vmatpush2.bf16.xpose.msra.mxu0 0
  %488 = vmatprep.subr.bf16.mxu0 0
  %489 = vmatpush2.bf16.xpose.msra.mxu0 0
  %490 = vmatprep.subr.bf16.mxu0 0
  %491 = vmatpush2.bf16.xpose.msra.mxu0 0
  %492 = vmatprep.mubr.bf16.mxu0 %v394
  %493 = vmatmul.mubr.bf16.gmra.mxu0 %v241
  %v494 = vpop.f32.mrf.mxu0
  %v495 = vadd.f32 %v455, %v494
  %v496 = vpop.f32.mrf.mxu0
  %v497 = vpop.f32.mrf.mxu0
  %v498 = vpop.f32.mrf.mxu0
  %499 = vdwg.mxu0
  %v500 = vmax.f32 %v495, 0.0
  %v501 = vpack.c.bf16 %v500, %v500
  %v502 = vld [vmem:[%s4] sm:$0xf]
  %v503 = vld [vmem:[%s4 + $0x4] sm:$0xf]
  %v504 = vld [vmem:[%s4 + $0x8] sm:$0xf]
  %v505 = vld [vmem:[%s4 + $0xc] sm:$0xf]
  %v506 = vld [vmem:[%s4 + $0x10] sm:$0xf]
  %v507 = vld [vmem:[%s4 + $0x14] sm:$0xf]
  %v508 = vld [vmem:[%s4 + $0x18] sm:$0xf]
  %v509 = vld [vmem:[%s4 + $0x1c] sm:$0xf]
  %v510 = vld [vmem:[%s4 + $0x20] sm:$0xf]
  %v511 = vld [vmem:[%s4 + $0x24] sm:$0xf]
  %v512 = vld [vmem:[%s4 + $0x28] sm:$0xf]
  %v513 = vld [vmem:[%s4 + $0x2c] sm:$0xf]
  %v514 = vld [vmem:[%s4 + $0x30] sm:$0xf]
  %v515 = vld [vmem:[%s4 + $0x34] sm:$0xf]
  %v516 = vld [vmem:[%s4 + $0x38] sm:$0xf]
  %v517 = vld [vmem:[%s4 + $0x3c] sm:$0xf]
  %v518 = vld [vmem:[%s4 + $0x40] sm:$0xf]
  %v519 = vld [vmem:[%s4 + $0x44] sm:$0xf]
  %v520 = vld [vmem:[%s4 + $0x48] sm:$0xf]
  %v521 = vld [vmem:[%s4 + $0x4c] sm:$0xf]
  %v522 = vld [vmem:[%s4 + $0x50] sm:$0xf]
  %v523 = vld [vmem:[%s4 + $0x54] sm:$0xf]
  %v524 = vld [vmem:[%s4 + $0x58] sm:$0xf]
  %v525 = vld [vmem:[%s4 + $0x5c] sm:$0xf]
  %v526 = vld [vmem:[%s4 + $0x60] sm:$0xf]
  %v527 = vld [vmem:[%s4 + $0x64] sm:$0xf]
  %v528 = vld [vmem:[%s4 + $0x68] sm:$0xf]
  %v529 = vld [vmem:[%s4 + $0x6c] sm:$0xf]
  %v530 = vld [vmem:[%s4 + $0x70] sm:$0xf]
  %v531 = vld [vmem:[%s4 + $0x74] sm:$0xf]
  %v532 = vld [vmem:[%s4 + $0x78] sm:$0xf]
  %v533 = vld [vmem:[%s4 + $0x7c] sm:$0xf]
  %v534 = vld [vmem:[%s4 + $0x80] sm:$0xf]
  %v535 = vld [vmem:[%s4 + $0x84] sm:$0xf]
  %v536 = vld [vmem:[%s4 + $0x88] sm:$0xf]
  %v537 = vld [vmem:[%s4 + $0x8c] sm:$0xf]
  %v538 = vld [vmem:[%s4 + $0x90] sm:$0xf]
  %v539 = vld [vmem:[%s4 + $0x94] sm:$0xf]
  %v540 = vld [vmem:[%s4 + $0x98] sm:$0xf]
  %v541 = vld [vmem:[%s4 + $0x9c] sm:$0xf]
  %v542 = vld [vmem:[%s4 + $0xa0] sm:$0xf]
  %v543 = vld [vmem:[%s4 + $0xa4] sm:$0xf]
  %v544 = vld [vmem:[%s4 + $0xa8] sm:$0xf]
  %v545 = vld [vmem:[%s4 + $0xac] sm:$0xf]
  %v546 = vld [vmem:[%s4 + $0xb0] sm:$0xf]
  %v547 = vld [vmem:[%s4 + $0xb4] sm:$0xf]
  %v548 = vld [vmem:[%s4 + $0xb8] sm:$0xf]
  %v549 = vld [vmem:[%s4 + $0xbc] sm:$0xf]
  %v550 = vld [vmem:[%s4 + $0xc0] sm:$0xf]
  %v551 = vld [vmem:[%s4 + $0xc4] sm:$0xf]
  %v552 = vld [vmem:[%s4 + $0xc8] sm:$0xf]
  %v553 = vld [vmem:[%s4 + $0xcc] sm:$0xf]
  %v554 = vld [vmem:[%s4 + $0xd0] sm:$0xf]
  %v555 = vld [vmem:[%s4 + $0xd4] sm:$0xf]
  %v556 = vld [vmem:[%s4 + $0xd8] sm:$0xf]
  %v557 = vld [vmem:[%s4 + $0xdc] sm:$0xf]
  %v558 = vld [vmem:[%s4 + $0xe0] sm:$0xf]
  %v559 = vld [vmem:[%s4 + $0xe4] sm:$0xf]
  %v560 = vld [vmem:[%s4 + $0xe8] sm:$0xf]
  %v561 = vld [vmem:[%s4 + $0xec] sm:$0xf]
  %v562 = vld [vmem:[%s5] sm:$0xf]
  %v623 = vunpack.c.l.b16 %v502
  %v624 = vunpack.c.l.b16 %v503
  %v625 = vunpack.c.l.b16 %v504
  %v626 = vunpack.c.l.b16 %v505
  %v627 = vunpack.c.l.b16 %v506
  %v628 = vunpack.c.l.b16 %v507
  %v629 = vunpack.c.l.b16 %v508
  %v630 = vunpack.c.l.b16 %v509
  %v631 = vunpack.c.l.b16 %v510
  %v632 = vunpack.c.l.b16 %v511
  %v633 = vunpack.c.l.b16 %v512
  %v634 = vunpack.c.l.b16 %v513
  %v635 = vunpack.c.l.b16 %v514
  %v636 = vunpack.c.l.b16 %v515
  %v637 = vunpack.c.l.b16 %v516
  %v638 = vunpack.c.l.b16 %v517
  %v639 = vunpack.c.l.b16 %v518
  %v640 = vunpack.c.l.b16 %v519
  %v641 = vunpack.c.l.b16 %v520
  %v642 = vunpack.c.l.b16 %v521
  %v643 = vunpack.c.l.b16 %v522
  %v644 = vunpack.c.l.b16 %v523
  %v645 = vunpack.c.l.b16 %v524
  %v646 = vunpack.c.l.b16 %v525
  %v647 = vunpack.c.l.b16 %v526
  %v648 = vunpack.c.l.b16 %v527
  %v649 = vunpack.c.l.b16 %v528
  %v650 = vunpack.c.l.b16 %v529
  %v651 = vunpack.c.l.b16 %v530
  %v652 = vunpack.c.l.b16 %v531
  %v653 = vunpack.c.l.b16 %v532
  %v654 = vunpack.c.l.b16 %v533
  %v655 = vunpack.c.l.b16 %v534
  %v656 = vunpack.c.l.b16 %v535
  %v657 = vunpack.c.l.b16 %v536
  %v658 = vunpack.c.l.b16 %v537
  %v659 = vunpack.c.l.b16 %v538
  %v660 = vunpack.c.l.b16 %v539
  %v661 = vunpack.c.l.b16 %v540
  %v662 = vunpack.c.l.b16 %v541
  %v663 = vunpack.c.l.b16 %v542
  %v664 = vunpack.c.l.b16 %v543
  %v665 = vunpack.c.l.b16 %v544
  %v666 = vunpack.c.l.b16 %v545
  %v667 = vunpack.c.l.b16 %v546
  %v668 = vunpack.c.l.b16 %v547
  %v669 = vunpack.c.l.b16 %v548
  %v670 = vunpack.c.l.b16 %v549
  %v671 = vunpack.c.l.b16 %v550
  %v672 = vunpack.c.l.b16 %v551
  %v673 = vunpack.c.l.b16 %v552
  %v674 = vunpack.c.l.b16 %v553
  %v675 = vunpack.c.l.b16 %v554
  %v676 = vunpack.c.l.b16 %v555
  %v677 = vunpack.c.l.b16 %v556
  %v678 = vunpack.c.l.b16 %v557
  %v679 = vunpack.c.l.b16 %v558
  %v680 = vunpack.c.l.b16 %v559
  %v681 = vunpack.c.l.b16 %v560
  %v682 = vunpack.c.l.b16 %v561
  %v683 = vpack.c.b16 %v624, %v623
  %v684 = vpack.c.b16 %v626, %v625
  %v685 = vpack.c.b16 %v628, %v627
  %v686 = vpack.c.b16 %v630, %v629
  %v687 = vpack.c.b16 %v632, %v631
  %v688 = vpack.c.b16 %v634, %v633
  %v689 = vpack.c.b16 %v636, %v635
  %v690 = vpack.c.b16 %v638, %v637
  %v691 = vpack.c.b16 %v640, %v639
  %v692 = vpack.c.b16 %v642, %v641
  %v693 = vpack.c.b16 %v644, %v643
  %v694 = vpack.c.b16 %v646, %v645
  %v695 = vpack.c.b16 %v648, %v647
  %v696 = vpack.c.b16 %v650, %v649
  %v697 = vpack.c.b16 %v652, %v651
  %v698 = vpack.c.b16 %v654, %v653
  %v699 = vpack.c.b16 %v656, %v655
  %v700 = vpack.c.b16 %v658, %v657
  %v701 = vpack.c.b16 %v660, %v659
  %v702 = vpack.c.b16 %v662, %v661
  %v703 = vpack.c.b16 %v664, %v663
  %v704 = vpack.c.b16 %v666, %v665
  %v705 = vpack.c.b16 %v668, %v667
  %v706 = vpack.c.b16 %v670, %v669
  %v707 = vpack.c.b16 %v672, %v671
  %v708 = vpack.c.b16 %v674, %v673
  %v709 = vpack.c.b16 %v676, %v675
  %v710 = vpack.c.b16 %v678, %v677
  %v711 = vpack.c.b16 %v680, %v679
  %v712 = vpack.c.b16 %v682, %v681
  %v714 = vlaneseq
  %v715 = vshrl.u32 %v714, 7
  %v716 = vsub.s32 0, %v715
  %v717 = vrot.slane %v562, %v716
  %v718 = vlaneseq
  %v719 = vshrl.u32 %v718, 7
  %v720 = vsub.s32 1, %v719
  %v721 = vrot.slane %v562, %v720
  %v722 = vlaneseq
  %v723 = vshrl.u32 %v722, 7
  %v724 = vsub.s32 2, %v723
  %v725 = vrot.slane %v562, %v724
  %v726 = vlaneseq
  %v727 = vshrl.u32 %v726, 7
  %v728 = vsub.s32 3, %v727
  %v729 = vrot.slane %v562, %v728
  %vm734 = vcmask 982016
  %v736 = vsel %vm734, %v501, 0
  %v739 = vsel %vm734, %v683, 0
  %v742 = vsel %vm734, %v684, 0
  %v745 = vsel %vm734, %v685, 0
  %v748 = vsel %vm734, %v686, 0
  %v751 = vsel %vm734, %v687, 0
  %v754 = vsel %vm734, %v688, 0
  %v757 = vsel %vm734, %v689, 0
  %v760 = vsel %vm734, %v690, 0
  %v763 = vsel %vm734, %v691, 0
  %v766 = vsel %vm734, %v692, 0
  %v769 = vsel %vm734, %v693, 0
  %v772 = vsel %vm734, %v694, 0
  %v775 = vsel %vm734, %v695, 0
  %v778 = vsel %vm734, %v696, 0
  %v781 = vsel %vm734, %v697, 0
  %v784 = vsel %vm734, %v698, 0
  %v787 = vsel %vm734, %v699, 0
  %v790 = vsel %vm734, %v700, 0
  %v793 = vsel %vm734, %v701, 0
  %v796 = vsel %vm734, %v702, 0
  %v799 = vsel %vm734, %v703, 0
  %v802 = vsel %vm734, %v704, 0
  %v805 = vsel %vm734, %v705, 0
  %v808 = vsel %vm734, %v706, 0
  %v811 = vsel %vm734, %v707, 0
  %v814 = vsel %vm734, %v708, 0
  %v817 = vsel %vm734, %v709, 0
  %v820 = vsel %vm734, %v710, 0
  %v823 = vsel %vm734, %v711, 0
  %v826 = vsel %vm734, %v712, 0
  %828 = vmatprep.subr.bf16.mxu0 0
  %829 = vmatpush1.bf16.xpose.msra.mxu0 %v760
  %830 = vmatprep.subr.bf16.mxu0 0
  %831 = vmatpush1.bf16.xpose.msra.mxu0 %v757
  %832 = vmatprep.subr.bf16.mxu0 0
  %833 = vmatpush1.bf16.xpose.msra.mxu0 %v754
  %834 = vmatprep.subr.bf16.mxu0 0
  %835 = vmatpush1.bf16.xpose.msra.mxu0 %v751
  %836 = vmatprep.subr.bf16.mxu0 0
  %837 = vmatpush1.bf16.xpose.msra.mxu0 %v748
  %838 = vmatprep.subr.bf16.mxu0 0
  %839 = vmatpush1.bf16.xpose.msra.mxu0 %v745
  %840 = vmatprep.subr.bf16.mxu0 0
  %841 = vmatpush1.bf16.xpose.msra.mxu0 %v742
  %842 = vmatprep.subr.bf16.mxu0 0
  %843 = vmatpush1.bf16.xpose.msra.mxu0 %v739
  %844 = vmatprep.subr.bf16.mxu0 0
  %845 = vmatpush2.bf16.xpose.msra.mxu0 %v784
  %846 = vmatprep.subr.bf16.mxu0 0
  %847 = vmatpush2.bf16.xpose.msra.mxu0 %v781
  %848 = vmatprep.subr.bf16.mxu0 0
  %849 = vmatpush2.bf16.xpose.msra.mxu0 %v778
  %850 = vmatprep.subr.bf16.mxu0 0
  %851 = vmatpush2.bf16.xpose.msra.mxu0 %v775
  %852 = vmatprep.subr.bf16.mxu0 0
  %853 = vmatpush2.bf16.xpose.msra.mxu0 %v772
  %854 = vmatprep.subr.bf16.mxu0 0
  %855 = vmatpush2.bf16.xpose.msra.mxu0 %v769
  %856 = vmatprep.subr.bf16.mxu0 0
  %857 = vmatpush2.bf16.xpose.msra.mxu0 %v766
  %858 = vmatprep.subr.bf16.mxu0 0
  %859 = vmatpush2.bf16.xpose.msra.mxu0 %v763
  %860 = vmatprep.mubr.bf16.mxu0 0
  %861 = vmatmul.mubr.bf16.gmra.mxu0 %v736
  %v862 = vpop.f32.mrf.mxu0
  %v863 = vadd.f32 %v717, %v862
  %v864 = vpop.f32.mrf.mxu0
  %v865 = vadd.f32 %v721, %v864
  %v866 = vpop.f32.mrf.mxu0
  %v867 = vpop.f32.mrf.mxu0
  %868 = vdwg.mxu0
  %869 = vmatprep.subr.bf16.mxu0 0
  %870 = vmatpush1.bf16.xpose.msra.mxu0 %v808
  %871 = vmatprep.subr.bf16.mxu0 0
  %872 = vmatpush1.bf16.xpose.msra.mxu0 %v805
  %873 = vmatprep.subr.bf16.mxu0 0
  %874 = vmatpush1.bf16.xpose.msra.mxu0 %v802
  %875 = vmatprep.subr.bf16.mxu0 0
  %876 = vmatpush1.bf16.xpose.msra.mxu0 %v799
  %877 = vmatprep.subr.bf16.mxu0 0
  %878 = vmatpush1.bf16.xpose.msra.mxu0 %v796
  %879 = vmatprep.subr.bf16.mxu0 0
  %880 = vmatpush1.bf16.xpose.msra.mxu0 %v793
  %881 = vmatprep.subr.bf16.mxu0 0
  %882 = vmatpush1.bf16.xpose.msra.mxu0 %v790
  %883 = vmatprep.subr.bf16.mxu0 0
  %884 = vmatpush1.bf16.xpose.msra.mxu0 %v787
  %885 = vmatprep.subr.bf16.mxu0 0
  %886 = vmatpush2.bf16.xpose.msra.mxu0 0
  %887 = vmatprep.subr.bf16.mxu0 0
  %888 = vmatpush2.bf16.xpose.msra.mxu0 0
  %889 = vmatprep.subr.bf16.mxu0 0
  %890 = vmatpush2.bf16.xpose.msra.mxu0 %v826
  %891 = vmatprep.subr.bf16.mxu0 0
  %892 = vmatpush2.bf16.xpose.msra.mxu0 %v823
  %893 = vmatprep.subr.bf16.mxu0 0
  %894 = vmatpush2.bf16.xpose.msra.mxu0 %v820
  %895 = vmatprep.subr.bf16.mxu0 0
  %896 = vmatpush2.bf16.xpose.msra.mxu0 %v817
  %897 = vmatprep.subr.bf16.mxu0 0
  %898 = vmatpush2.bf16.xpose.msra.mxu0 %v814
  %899 = vmatprep.subr.bf16.mxu0 0
  %900 = vmatpush2.bf16.xpose.msra.mxu0 %v811
  %901 = vmatprep.mubr.bf16.mxu0 0
  %902 = vmatmul.mubr.bf16.gmra.mxu0 %v736
  %v903 = vpop.f32.mrf.mxu0
  %v904 = vadd.f32 %v725, %v903
  %v905 = vpop.f32.mrf.mxu0
  %v906 = vadd.f32 %v729, %v905
  %v907 = vpop.f32.mrf.mxu0
  %v908 = vpop.f32.mrf.mxu0
  %909 = vdwg.mxu0
  %v910 = vmul.f32 %v863, 0.16666667
  %v911 = vmul.f32 %v865, 0.16666667
  %v912 = vmul.f32 %v904, 0.16666667
  %v913 = vmul.f32 %v906, 0.16666667
  %v914 = vadd.f32 %v910, 0.5
  %v915 = vadd.f32 %v911, 0.5
  %v916 = vadd.f32 %v912, 0.5
  %v917 = vadd.f32 %v913, 0.5
  %v918 = vmax.f32 %v914, 0.0
  %v919 = vmax.f32 %v915, 0.0
  %v920 = vmax.f32 %v916, 0.0
  %v921 = vmax.f32 %v917, 0.0
  %v922 = vmin.f32 %v918, 1.0
  %v923 = vmin.f32 %v919, 1.0
  %v924 = vmin.f32 %v920, 1.0
  %v925 = vmin.f32 %v921, 1.0
  %v926 = vld [vmem:[%s6] sm:$0xff]
  %v927 = vld [vmem:[%s6 + $0x8] sm:$0xff]
  %v928 = vld [vmem:[%s6 + $0x10] sm:$0xff]
  %v929 = vld [vmem:[%s6 + $0x18] sm:$0xff]
  %v930 = vld [vmem:[%s6 + $0x20] sm:$0xff]
  %v931 = vld [vmem:[%s6 + $0x28] sm:$0xff]
  %v932 = vld [vmem:[%s6 + $0x30] sm:$0xff]
  %v933 = vld [vmem:[%s6 + $0x38] sm:$0xff]
  %v934 = vld [vmem:[%s6 + $0x40] sm:$0xff]
  %v935 = vld [vmem:[%s6 + $0x48] sm:$0xff]
  %v936 = vld [vmem:[%s6 + $0x50] sm:$0xff]
  %v937 = vld [vmem:[%s6 + $0x58] sm:$0xff]
  %v938 = vld [vmem:[%s6 + $0x60] sm:$0xff]
  %v939 = vld [vmem:[%s6 + $0x68] sm:$0xff]
  %v940 = vld [vmem:[%s6 + $0x70] sm:$0xff]
  %v941 = vld [vmem:[%s6 + $0x78] sm:$0xff]
  %v942 = vld [vmem:[%s6 + $0x80] sm:$0xff]
  %v943 = vld [vmem:[%s6 + $0x88] sm:$0xff]
  %v944 = vld [vmem:[%s6 + $0x90] sm:$0xff]
  %v945 = vld [vmem:[%s6 + $0x98] sm:$0xff]
  %v946 = vld [vmem:[%s6 + $0xa0] sm:$0xff]
  %v947 = vld [vmem:[%s6 + $0xa8] sm:$0xff]
  %v948 = vld [vmem:[%s6 + $0xb0] sm:$0xff]
  %v949 = vld [vmem:[%s6 + $0xb8] sm:$0xff]
  %v950 = vld [vmem:[%s6 + $0xc0] sm:$0xff]
  %v951 = vld [vmem:[%s6 + $0xc8] sm:$0xff]
  %v952 = vld [vmem:[%s6 + $0xd0] sm:$0xff]
  %v953 = vld [vmem:[%s6 + $0xd8] sm:$0xff]
  %v954 = vpack.c.bf16 %v922, %v922
  %v955 = vpack.c.bf16 %v923, %v923
  %v956 = vpack.c.bf16 %v924, %v924
  %v957 = vpack.c.bf16 %v925, %v925
  %v959 = vpack.i.b16 %v954, %v954
  %v961 = vlaneseq
  %v962 = vshrl.u32 %v961, 7
  %v963 = vsub.s32 0, %v962
  %v964 = vrot.slane %v959, %v963
  %v966 = vpack.i.b16 %v955, %v955
  %v968 = vlaneseq
  %v969 = vshrl.u32 %v968, 7
  %v970 = vsub.s32 0, %v969
  %v971 = vrot.slane %v966, %v970
  %v973 = vpack.i.b16 %v956, %v956
  %v975 = vlaneseq
  %v976 = vshrl.u32 %v975, 7
  %v977 = vsub.s32 0, %v976
  %v978 = vrot.slane %v973, %v977
  %v980 = vpack.i.b16 %v957, %v957
  %v982 = vlaneseq
  %v983 = vshrl.u32 %v982, 7
  %v984 = vsub.s32 0, %v983
  %v985 = vrot.slane %v980, %v984
  %v990 = vunpack.c.l.b16 %v964
  %v991 = vunpack.c.l.b16 %v971
  %v992 = vunpack.c.l.b16 %v978
  %v993 = vunpack.c.l.b16 %v985
  %v994 = vpack.c.b16 %v991, %v990
  %v995 = vpack.c.b16 %v993, %v992
  %v998 = vmul.bf16 %v926, %v994
  %v999 = vmul.bf16 %v927, %v995
  %v1000 = vmul.bf16 %v928, %v994
  %v1001 = vmul.bf16 %v929, %v995
  %v1002 = vmul.bf16 %v930, %v994
  %v1003 = vmul.bf16 %v931, %v995
  %v1004 = vmul.bf16 %v932, %v994
  %v1005 = vmul.bf16 %v933, %v995
  %v1006 = vmul.bf16 %v934, %v994
  %v1007 = vmul.bf16 %v935, %v995
  %v1008 = vmul.bf16 %v936, %v994
  %v1009 = vmul.bf16 %v937, %v995
  %v1010 = vmul.bf16 %v938, %v994
  %v1011 = vmul.bf16 %v939, %v995
  %v1012 = vmul.bf16 %v940, %v994
  %v1013 = vmul.bf16 %v941, %v995
  %v1014 = vmul.bf16 %v942, %v994
  %v1015 = vmul.bf16 %v943, %v995
  %v1016 = vmul.bf16 %v944, %v994
  %v1017 = vmul.bf16 %v945, %v995
  %v1018 = vmul.bf16 %v946, %v994
  %v1019 = vmul.bf16 %v947, %v995
  %v1020 = vmul.bf16 %v948, %v994
  %v1021 = vmul.bf16 %v949, %v995
  %v1022 = vmul.bf16 %v950, %v994
  %v1023 = vmul.bf16 %v951, %v995
  %v1024 = vmul.bf16 %v952, %v994
  %v1025 = vmul.bf16 %v953, %v995
  %s1026 = smul.u32 4, 60
  %s1027 = smul.u32 %s1026, 2
  %s1028 = sshll.u32 %s1027, 4
  %1029 = dma.done [#allocation3], %s1028
  %v1030 = vld [vmem:[#allocation2] sm:$0xff]
  %v1031 = vld [vmem:[#allocation2 + $0x8] sm:$0xff]
  %v1032 = vld [vmem:[#allocation2 + $0x10] sm:$0xff]
  %v1033 = vld [vmem:[#allocation2 + $0x18] sm:$0xff]
  %v1034 = vld [vmem:[#allocation2 + $0x20] sm:$0xff]
  %v1035 = vld [vmem:[#allocation2 + $0x28] sm:$0xff]
  %v1036 = vld [vmem:[#allocation2 + $0x30] sm:$0xff]
  %v1037 = vld [vmem:[#allocation2 + $0x38] sm:$0xff]
  %v1038 = vld [vmem:[#allocation2 + $0x40] sm:$0xff]
  %v1039 = vld [vmem:[#allocation2 + $0x48] sm:$0xff]
  %v1040 = vld [vmem:[#allocation2 + $0x50] sm:$0xff]
  %v1041 = vld [vmem:[#allocation2 + $0x58] sm:$0xff]
  %v1042 = vld [vmem:[#allocation2 + $0x60] sm:$0xff]
  %v1043 = vld [vmem:[#allocation2 + $0x68] sm:$0xff]
  %v1044 = vld [vmem:[#allocation2 + $0x70] sm:$0xff]
  %v1045 = vld [vmem:[#allocation2 + $0x78] sm:$0xff]
  %v1046 = vld [vmem:[#allocation2 + $0x80] sm:$0xff]
  %v1047 = vld [vmem:[#allocation2 + $0x88] sm:$0xff]
  %v1048 = vld [vmem:[#allocation2 + $0x90] sm:$0xff]
  %v1049 = vld [vmem:[#allocation2 + $0x98] sm:$0xff]
  %v1050 = vld [vmem:[#allocation2 + $0xa0] sm:$0xff]
  %v1051 = vld [vmem:[#allocation2 + $0xa8] sm:$0xff]
  %v1052 = vld [vmem:[#allocation2 + $0xb0] sm:$0xff]
  %v1053 = vld [vmem:[#allocation2 + $0xb8] sm:$0xff]
  %v1054 = vld [vmem:[#allocation2 + $0xc0] sm:$0xff]
  %v1055 = vld [vmem:[#allocation2 + $0xc8] sm:$0xff]
  %v1056 = vld [vmem:[#allocation2 + $0xd0] sm:$0xff]
  %v1057 = vld [vmem:[#allocation2 + $0xd8] sm:$0xff]
  %v1058 = vld [vmem:[#allocation2 + $0xe0] sm:$0xff]
  %v1059 = vld [vmem:[#allocation2 + $0xe8] sm:$0xff]
  %v1060 = vld [vmem:[#allocation2 + $0xf0] sm:$0xff]
  %v1061 = vld [vmem:[#allocation2 + $0xf8] sm:$0xff]
  %v1062 = vld [vmem:[#allocation2 + $0x100] sm:$0xff]
  %v1063 = vld [vmem:[#allocation2 + $0x108] sm:$0xff]
  %v1064 = vld [vmem:[#allocation2 + $0x110] sm:$0xff]
  %v1065 = vld [vmem:[#allocation2 + $0x118] sm:$0xff]
  %v1066 = vld [vmem:[#allocation2 + $0x120] sm:$0xff]
  %v1067 = vld [vmem:[#allocation2 + $0x128] sm:$0xff]
  %v1068 = vld [vmem:[#allocation2 + $0x130] sm:$0xff]
  %v1069 = vld [vmem:[#allocation2 + $0x138] sm:$0xff]
  %v1070 = vld [vmem:[#allocation2 + $0x140] sm:$0xff]
  %v1071 = vld [vmem:[#allocation2 + $0x148] sm:$0xff]
  %v1072 = vld [vmem:[#allocation2 + $0x150] sm:$0xff]
  %v1073 = vld [vmem:[#allocation2 + $0x158] sm:$0xff]
  %v1074 = vld [vmem:[#allocation2 + $0x160] sm:$0xff]
  %v1075 = vld [vmem:[#allocation2 + $0x168] sm:$0xff]
  %v1076 = vld [vmem:[#allocation2 + $0x170] sm:$0xff]
  %v1077 = vld [vmem:[#allocation2 + $0x178] sm:$0xff]
  %v1078 = vld [vmem:[#allocation2 + $0x180] sm:$0xff]
  %v1079 = vld [vmem:[#allocation2 + $0x188] sm:$0xff]
  %v1080 = vld [vmem:[#allocation2 + $0x190] sm:$0xff]
  %v1081 = vld [vmem:[#allocation2 + $0x198] sm:$0xff]
  %v1082 = vld [vmem:[#allocation2 + $0x1a0] sm:$0xff]
  %v1083 = vld [vmem:[#allocation2 + $0x1a8] sm:$0xff]
  %v1084 = vld [vmem:[#allocation2 + $0x1b0] sm:$0xff]
  %v1085 = vld [vmem:[#allocation2 + $0x1b8] sm:$0xff]
  %v1086 = vld [vmem:[#allocation2 + $0x1c0] sm:$0xff]
  %v1087 = vld [vmem:[#allocation2 + $0x1c8] sm:$0xff]
  %v1088 = vld [vmem:[#allocation2 + $0x1d0] sm:$0xff]
  %v1089 = vld [vmem:[#allocation2 + $0x1d8] sm:$0xff]
  %v1118 = vunpack.c.l.b16 %v998
  %v1119 = vunpack.c.h.b16 %v998
  %v1120 = vunpack.c.l.b16 %v999
  %v1121 = vunpack.c.h.b16 %v999
  %v1122 = vunpack.c.l.b16 %v1000
  %v1123 = vunpack.c.h.b16 %v1000
  %v1124 = vunpack.c.l.b16 %v1001
  %v1125 = vunpack.c.h.b16 %v1001
  %v1126 = vunpack.c.l.b16 %v1002
  %v1127 = vunpack.c.h.b16 %v1002
  %v1128 = vunpack.c.l.b16 %v1003
  %v1129 = vunpack.c.h.b16 %v1003
  %v1130 = vunpack.c.l.b16 %v1004
  %v1131 = vunpack.c.h.b16 %v1004
  %v1132 = vunpack.c.l.b16 %v1005
  %v1133 = vunpack.c.h.b16 %v1005
  %v1134 = vunpack.c.l.b16 %v1006
  %v1135 = vunpack.c.h.b16 %v1006
  %v1136 = vunpack.c.l.b16 %v1007
  %v1137 = vunpack.c.h.b16 %v1007
  %v1138 = vunpack.c.l.b16 %v1008
  %v1139 = vunpack.c.h.b16 %v1008
  %v1140 = vunpack.c.l.b16 %v1009
  %v1141 = vunpack.c.h.b16 %v1009
  %v1142 = vunpack.c.l.b16 %v1010
  %v1143 = vunpack.c.h.b16 %v1010
  %v1144 = vunpack.c.l.b16 %v1011
  %v1145 = vunpack.c.h.b16 %v1011
  %v1146 = vunpack.c.l.b16 %v1012
  %v1147 = vunpack.c.h.b16 %v1012
  %v1148 = vunpack.c.l.b16 %v1013
  %v1149 = vunpack.c.h.b16 %v1013
  %v1150 = vunpack.c.l.b16 %v1014
  %v1151 = vunpack.c.h.b16 %v1014
  %v1152 = vunpack.c.l.b16 %v1015
  %v1153 = vunpack.c.h.b16 %v1015
  %v1154 = vunpack.c.l.b16 %v1016
  %v1155 = vunpack.c.h.b16 %v1016
  %v1156 = vunpack.c.l.b16 %v1017
  %v1157 = vunpack.c.h.b16 %v1017
  %v1158 = vunpack.c.l.b16 %v1018
  %v1159 = vunpack.c.h.b16 %v1018
  %v1160 = vunpack.c.l.b16 %v1019
  %v1161 = vunpack.c.h.b16 %v1019
  %v1162 = vunpack.c.l.b16 %v1020
  %v1163 = vunpack.c.h.b16 %v1020
  %v1164 = vunpack.c.l.b16 %v1021
  %v1165 = vunpack.c.h.b16 %v1021
  %v1166 = vunpack.c.l.b16 %v1022
  %v1167 = vunpack.c.h.b16 %v1022
  %v1168 = vunpack.c.l.b16 %v1023
  %v1169 = vunpack.c.h.b16 %v1023
  %v1170 = vunpack.c.l.b16 %v1024
  %v1171 = vunpack.c.h.b16 %v1024
  %v1172 = vunpack.c.l.b16 %v1025
  %v1173 = vunpack.c.h.b16 %v1025
  %v1174 = vpack.c.b16 %v1122, %v1118
  %v1175 = vpack.c.b16 %v1123, %v1119
  %v1176 = vpack.c.b16 %v1124, %v1120
  %v1177 = vpack.c.b16 %v1125, %v1121
  %v1178 = vpack.c.b16 %v1130, %v1126
  %v1179 = vpack.c.b16 %v1131, %v1127
  %v1180 = vpack.c.b16 %v1132, %v1128
  %v1181 = vpack.c.b16 %v1133, %v1129
  %v1182 = vpack.c.b16 %v1138, %v1134
  %v1183 = vpack.c.b16 %v1139, %v1135
  %v1184 = vpack.c.b16 %v1140, %v1136
  %v1185 = vpack.c.b16 %v1141, %v1137
  %v1186 = vpack.c.b16 %v1146, %v1142
  %v1187 = vpack.c.b16 %v1147, %v1143
  %v1188 = vpack.c.b16 %v1148, %v1144
  %v1189 = vpack.c.b16 %v1149, %v1145
  %v1190 = vpack.c.b16 %v1154, %v1150
  %v1191 = vpack.c.b16 %v1155, %v1151
  %v1192 = vpack.c.b16 %v1156, %v1152
  %v1193 = vpack.c.b16 %v1157, %v1153
  %v1194 = vpack.c.b16 %v1162, %v1158
  %v1195 = vpack.c.b16 %v1163, %v1159
  %v1196 = vpack.c.b16 %v1164, %v1160
  %v1197 = vpack.c.b16 %v1165, %v1161
  %v1198 = vpack.c.b16 %v1170, %v1166
  %v1199 = vpack.c.b16 %v1171, %v1167
  %v1200 = vpack.c.b16 %v1172, %v1168
  %v1201 = vpack.c.b16 %v1173, %v1169
  %v1283 = vunpack.c.l.b16 %v1030
  %v1284 = vunpack.c.h.b16 %v1030
  %v1285 = vunpack.c.l.b16 %v1031
  %v1286 = vunpack.c.h.b16 %v1031
  %v1287 = vunpack.c.l.b16 %v1032
  %v1288 = vunpack.c.h.b16 %v1032
  %v1289 = vunpack.c.l.b16 %v1033
  %v1290 = vunpack.c.h.b16 %v1033
  %v1291 = vunpack.c.l.b16 %v1034
  %v1292 = vunpack.c.h.b16 %v1034
  %v1293 = vunpack.c.l.b16 %v1035
  %v1294 = vunpack.c.h.b16 %v1035
  %v1295 = vunpack.c.l.b16 %v1036
  %v1296 = vunpack.c.h.b16 %v1036
  %v1297 = vunpack.c.l.b16 %v1037
  %v1298 = vunpack.c.h.b16 %v1037
  %v1299 = vunpack.c.l.b16 %v1038
  %v1300 = vunpack.c.h.b16 %v1038
  %v1301 = vunpack.c.l.b16 %v1039
  %v1302 = vunpack.c.h.b16 %v1039
  %v1303 = vunpack.c.l.b16 %v1040
  %v1304 = vunpack.c.h.b16 %v1040
  %v1305 = vunpack.c.l.b16 %v1041
  %v1306 = vunpack.c.h.b16 %v1041
  %v1307 = vunpack.c.l.b16 %v1042
  %v1308 = vunpack.c.h.b16 %v1042
  %v1309 = vunpack.c.l.b16 %v1043
  %v1310 = vunpack.c.h.b16 %v1043
  %v1311 = vunpack.c.l.b16 %v1044
  %v1312 = vunpack.c.h.b16 %v1044
  %v1313 = vunpack.c.l.b16 %v1045
  %v1314 = vunpack.c.h.b16 %v1045
  %v1315 = vunpack.c.l.b16 %v1046
  %v1316 = vunpack.c.h.b16 %v1046
  %v1317 = vunpack.c.l.b16 %v1047
  %v1318 = vunpack.c.h.b16 %v1047
  %v1319 = vunpack.c.l.b16 %v1048
  %v1320 = vunpack.c.h.b16 %v1048
  %v1321 = vunpack.c.l.b16 %v1049
  %v1322 = vunpack.c.h.b16 %v1049
  %v1323 = vunpack.c.l.b16 %v1050
  %v1324 = vunpack.c.h.b16 %v1050
  %v1325 = vunpack.c.l.b16 %v1051
  %v1326 = vunpack.c.h.b16 %v1051
  %v1327 = vunpack.c.l.b16 %v1052
  %v1328 = vunpack.c.h.b16 %v1052
  %v1329 = vunpack.c.l.b16 %v1053
  %v1330 = vunpack.c.h.b16 %v1053
  %v1331 = vunpack.c.l.b16 %v1054
  %v1332 = vunpack.c.h.b16 %v1054
  %v1333 = vunpack.c.l.b16 %v1055
  %v1334 = vunpack.c.h.b16 %v1055
  %v1335 = vunpack.c.l.b16 %v1056
  %v1336 = vunpack.c.h.b16 %v1056
  %v1337 = vunpack.c.l.b16 %v1057
  %v1338 = vunpack.c.h.b16 %v1057
  %v1339 = vunpack.c.l.b16 %v1058
  %v1340 = vunpack.c.h.b16 %v1058
  %v1341 = vunpack.c.l.b16 %v1059
  %v1342 = vunpack.c.h.b16 %v1059
  %v1343 = vunpack.c.l.b16 %v1060
  %v1344 = vunpack.c.h.b16 %v1060
  %v1345 = vunpack.c.l.b16 %v1061
  %v1346 = vunpack.c.h.b16 %v1061
  %v1347 = vunpack.c.l.b16 %v1062
  %v1348 = vunpack.c.h.b16 %v1062
  %v1349 = vunpack.c.l.b16 %v1063
  %v1350 = vunpack.c.h.b16 %v1063
  %v1351 = vunpack.c.l.b16 %v1064
  %v1352 = vunpack.c.h.b16 %v1064
  %v1353 = vunpack.c.l.b16 %v1065
  %v1354 = vunpack.c.h.b16 %v1065
  %v1355 = vunpack.c.l.b16 %v1066
  %v1356 = vunpack.c.h.b16 %v1066
  %v1357 = vunpack.c.l.b16 %v1067
  %v1358 = vunpack.c.h.b16 %v1067
  %v1359 = vunpack.c.l.b16 %v1068
  %v1360 = vunpack.c.h.b16 %v1068
  %v1361 = vunpack.c.l.b16 %v1069
  %v1362 = vunpack.c.h.b16 %v1069
  %v1363 = vunpack.c.l.b16 %v1070
  %v1364 = vunpack.c.h.b16 %v1070
  %v1365 = vunpack.c.l.b16 %v1071
  %v1366 = vunpack.c.h.b16 %v1071
  %v1367 = vunpack.c.l.b16 %v1072
  %v1368 = vunpack.c.h.b16 %v1072
  %v1369 = vunpack.c.l.b16 %v1073
  %v1370 = vunpack.c.h.b16 %v1073
  %v1371 = vunpack.c.l.b16 %v1074
  %v1372 = vunpack.c.h.b16 %v1074
  %v1373 = vunpack.c.l.b16 %v1075
  %v1374 = vunpack.c.h.b16 %v1075
  %v1375 = vunpack.c.l.b16 %v1076
  %v1376 = vunpack.c.h.b16 %v1076
  %v1377 = vunpack.c.l.b16 %v1077
  %v1378 = vunpack.c.h.b16 %v1077
  %v1379 = vunpack.c.l.b16 %v1078
  %v1380 = vunpack.c.h.b16 %v1078
  %v1381 = vunpack.c.l.b16 %v1079
  %v1382 = vunpack.c.h.b16 %v1079
  %v1383 = vunpack.c.l.b16 %v1080
  %v1384 = vunpack.c.h.b16 %v1080
  %v1385 = vunpack.c.l.b16 %v1081
  %v1386 = vunpack.c.h.b16 %v1081
  %v1387 = vunpack.c.l.b16 %v1082
  %v1388 = vunpack.c.h.b16 %v1082
  %v1389 = vunpack.c.l.b16 %v1083
  %v1390 = vunpack.c.h.b16 %v1083
  %v1391 = vunpack.c.l.b16 %v1084
  %v1392 = vunpack.c.h.b16 %v1084
  %v1393 = vunpack.c.l.b16 %v1085
  %v1394 = vunpack.c.h.b16 %v1085
  %v1395 = vunpack.c.l.b16 %v1086
  %v1396 = vunpack.c.h.b16 %v1086
  %v1397 = vunpack.c.l.b16 %v1087
  %v1398 = vunpack.c.h.b16 %v1087
  %v1399 = vunpack.c.l.b16 %v1088
  %v1400 = vunpack.c.h.b16 %v1088
  %v1401 = vunpack.c.l.b16 %v1089
  %v1402 = vunpack.c.h.b16 %v1089
  %v1403 = vpack.c.b16 %v1285, %v1283
  %v1404 = vpack.c.b16 %v1286, %v1284
  %v1405 = vpack.c.b16 %v1289, %v1287
  %v1406 = vpack.c.b16 %v1290, %v1288
  %v1407 = vpack.c.b16 %v1293, %v1291
  %v1408 = vpack.c.b16 %v1294, %v1292
  %v1409 = vpack.c.b16 %v1297, %v1295
  %v1410 = vpack.c.b16 %v1298, %v1296
  %v1411 = vpack.c.b16 %v1301, %v1299
  %v1412 = vpack.c.b16 %v1302, %v1300
  %v1413 = vpack.c.b16 %v1305, %v1303
  %v1414 = vpack.c.b16 %v1306, %v1304
  %v1415 = vpack.c.b16 %v1309, %v1307
  %v1416 = vpack.c.b16 %v1310, %v1308
  %v1417 = vpack.c.b16 %v1313, %v1311
  %v1418 = vpack.c.b16 %v1314, %v1312
  %v1419 = vpack.c.b16 %v1317, %v1315
  %v1420 = vpack.c.b16 %v1318, %v1316
  %v1421 = vpack.c.b16 %v1321, %v1319
  %v1422 = vpack.c.b16 %v1322, %v1320
  %v1423 = vpack.c.b16 %v1325, %v1323
  %v1424 = vpack.c.b16 %v1326, %v1324
  %v1425 = vpack.c.b16 %v1329, %v1327
  %v1426 = vpack.c.b16 %v1330, %v1328
  %v1427 = vpack.c.b16 %v1333, %v1331
  %v1428 = vpack.c.b16 %v1334, %v1332
  %v1429 = vpack.c.b16 %v1337, %v1335
  %v1430 = vpack.c.b16 %v1338, %v1336
  %v1431 = vpack.c.b16 %v1341, %v1339
  %v1432 = vpack.c.b16 %v1342, %v1340
  %v1433 = vpack.c.b16 %v1345, %v1343
  %v1434 = vpack.c.b16 %v1346, %v1344
  %v1435 = vpack.c.b16 %v1349, %v1347
  %v1436 = vpack.c.b16 %v1350, %v1348
  %v1437 = vpack.c.b16 %v1353, %v1351
  %v1438 = vpack.c.b16 %v1354, %v1352
  %v1439 = vpack.c.b16 %v1357, %v1355
  %v1440 = vpack.c.b16 %v1358, %v1356
  %v1441 = vpack.c.b16 %v1361, %v1359
  %v1442 = vpack.c.b16 %v1362, %v1360
  %v1443 = vpack.c.b16 %v1365, %v1363
  %v1444 = vpack.c.b16 %v1366, %v1364
  %v1445 = vpack.c.b16 %v1369, %v1367
  %v1446 = vpack.c.b16 %v1370, %v1368
  %v1447 = vpack.c.b16 %v1373, %v1371
  %v1448 = vpack.c.b16 %v1374, %v1372
  %v1449 = vpack.c.b16 %v1377, %v1375
  %v1450 = vpack.c.b16 %v1378, %v1376
  %v1451 = vpack.c.b16 %v1381, %v1379
  %v1452 = vpack.c.b16 %v1382, %v1380
  %v1453 = vpack.c.b16 %v1385, %v1383
  %v1454 = vpack.c.b16 %v1386, %v1384
  %v1455 = vpack.c.b16 %v1389, %v1387
  %v1456 = vpack.c.b16 %v1390, %v1388
  %v1457 = vpack.c.b16 %v1393, %v1391
  %v1458 = vpack.c.b16 %v1394, %v1392
  %v1459 = vpack.c.b16 %v1397, %v1395
  %v1460 = vpack.c.b16 %v1398, %v1396
  %v1461 = vpack.c.b16 %v1401, %v1399
  %v1462 = vpack.c.b16 %v1402, %v1400
  %v1524 = vsel %vm392, %v1177, 0
  %v1527 = vsel %vm392, %v1181, 0
  %v1530 = vsel %vm392, %v1185, 0
  %v1533 = vsel %vm392, %v1189, 0
  %v1536 = vsel %vm392, %v1193, 0
  %v1539 = vsel %vm392, %v1197, 0
  %v1542 = vsel %vm392, %v1201, 0
  %1544 = vmatprep.subr.bf16.mxu0 %v1418
  %1545 = vmatpush1.bf16.msra.mxu0 %v1417
  %1546 = vmatprep.subr.bf16.mxu0 %v1416
  %1547 = vmatpush1.bf16.msra.mxu0 %v1415
  %1548 = vmatprep.subr.bf16.mxu0 %v1414
  %1549 = vmatpush1.bf16.msra.mxu0 %v1413
  %1550 = vmatprep.subr.bf16.mxu0 %v1412
  %1551 = vmatpush1.bf16.msra.mxu0 %v1411
  %1552 = vmatprep.subr.bf16.mxu0 %v1410
  %1553 = vmatpush1.bf16.msra.mxu0 %v1409
  %1554 = vmatprep.subr.bf16.mxu0 %v1408
  %1555 = vmatpush1.bf16.msra.mxu0 %v1407
  %1556 = vmatprep.subr.bf16.mxu0 %v1406
  %1557 = vmatpush1.bf16.msra.mxu0 %v1405
  %1558 = vmatprep.subr.bf16.mxu0 %v1404
  %1559 = vmatpush1.bf16.msra.mxu0 %v1403
  %1560 = vmatprep.subr.bf16.mxu0 %v1434
  %1561 = vmatpush2.bf16.msra.mxu0 %v1433
  %1562 = vmatprep.subr.bf16.mxu0 %v1432
  %1563 = vmatpush2.bf16.msra.mxu0 %v1431
  %1564 = vmatprep.subr.bf16.mxu0 %v1430
  %1565 = vmatpush2.bf16.msra.mxu0 %v1429
  %1566 = vmatprep.subr.bf16.mxu0 %v1428
  %1567 = vmatpush2.bf16.msra.mxu0 %v1427
  %1568 = vmatprep.subr.bf16.mxu0 %v1426
  %1569 = vmatpush2.bf16.msra.mxu0 %v1425
  %1570 = vmatprep.subr.bf16.mxu0 %v1424
  %1571 = vmatpush2.bf16.msra.mxu0 %v1423
  %1572 = vmatprep.subr.bf16.mxu0 %v1422
  %1573 = vmatpush2.bf16.msra.mxu0 %v1421
  %1574 = vmatprep.subr.bf16.mxu0 %v1420
  %1575 = vmatpush2.bf16.msra.mxu0 %v1419
  %1576 = vmatprep.mubr.bf16.mxu0 %v1175
  %1577 = vmatmul.mubr.bf16.gmra.mxu0 %v1174
  %v1578 = vpop.f32.mrf.mxu0
  %v1579 = vadd.f32 0.0, %v1578
  %v1580 = vpop.f32.mrf.mxu0
  %v1581 = vadd.f32 0.0, %v1580
  %v1582 = vpop.f32.mrf.mxu0
  %v1583 = vadd.f32 0.0, %v1582
  %v1584 = vpop.f32.mrf.mxu0
  %v1585 = vadd.f32 0.0, %v1584
  %1586 = vmatprep.mubr.bf16.mxu0 %v1179
  %1587 = vmatmul.mubr.bf16.gmra.mxu0 %v1178
  %v1588 = vpop.f32.mrf.mxu0
  %v1589 = vadd.f32 0.0, %v1588
  %v1590 = vpop.f32.mrf.mxu0
  %v1591 = vadd.f32 0.0, %v1590
  %v1592 = vpop.f32.mrf.mxu0
  %v1593 = vadd.f32 0.0, %v1592
  %v1594 = vpop.f32.mrf.mxu0
  %v1595 = vadd.f32 0.0, %v1594
  %1596 = vmatprep.mubr.bf16.mxu0 %v1183
  %1597 = vmatmul.mubr.bf16.gmra.mxu0 %v1182
  %v1598 = vpop.f32.mrf.mxu0
  %v1599 = vadd.f32 0.0, %v1598
  %v1600 = vpop.f32.mrf.mxu0
  %v1601 = vadd.f32 0.0, %v1600
  %v1602 = vpop.f32.mrf.mxu0
  %v1603 = vadd.f32 0.0, %v1602
  %v1604 = vpop.f32.mrf.mxu0
  %v1605 = vadd.f32 0.0, %v1604
  %1606 = vmatprep.mubr.bf16.mxu0 %v1187
  %1607 = vmatmul.mubr.bf16.gmra.mxu0 %v1186
  %v1608 = vpop.f32.mrf.mxu0
  %v1609 = vadd.f32 0.0, %v1608
  %v1610 = vpop.f32.mrf.mxu0
  %v1611 = vadd.f32 0.0, %v1610
  %v1612 = vpop.f32.mrf.mxu0
  %v1613 = vadd.f32 0.0, %v1612
  %v1614 = vpop.f32.mrf.mxu0
  %v1615 = vadd.f32 0.0, %v1614
  %1616 = vmatprep.mubr.bf16.mxu0 %v1191
  %1617 = vmatmul.mubr.bf16.gmra.mxu0 %v1190
  %v1618 = vpop.f32.mrf.mxu0
  %v1619 = vadd.f32 0.0, %v1618
  %v1620 = vpop.f32.mrf.mxu0
  %v1621 = vadd.f32 0.0, %v1620
  %v1622 = vpop.f32.mrf.mxu0
  %v1623 = vadd.f32 0.0, %v1622
  %v1624 = vpop.f32.mrf.mxu0
  %v1625 = vadd.f32 0.0, %v1624
  %1626 = vmatprep.mubr.bf16.mxu0 %v1195
  %1627 = vmatmul.mubr.bf16.gmra.mxu0 %v1194
  %v1628 = vpop.f32.mrf.mxu0
  %v1629 = vadd.f32 0.0, %v1628
  %v1630 = vpop.f32.mrf.mxu0
  %v1631 = vadd.f32 0.0, %v1630
  %v1632 = vpop.f32.mrf.mxu0
  %v1633 = vadd.f32 0.0, %v1632
  %v1634 = vpop.f32.mrf.mxu0
  %v1635 = vadd.f32 0.0, %v1634
  %1636 = vmatprep.mubr.bf16.mxu0 %v1199
  %1637 = vmatmul.mubr.bf16.gmra.mxu0 %v1198
  %v1638 = vpop.f32.mrf.mxu0
  %v1639 = vadd.f32 0.0, %v1638
  %v1640 = vpop.f32.mrf.mxu0
  %v1641 = vadd.f32 0.0, %v1640
  %v1642 = vpop.f32.mrf.mxu0
  %v1643 = vadd.f32 0.0, %v1642
  %v1644 = vpop.f32.mrf.mxu0
  %v1645 = vadd.f32 0.0, %v1644
  %1646 = vdwg.mxu0
  %1647 = vmatprep.subr.bf16.mxu0 %v1450
  %1648 = vmatpush1.bf16.msra.mxu0 %v1449
  %1649 = vmatprep.subr.bf16.mxu0 %v1448
  %1650 = vmatpush1.bf16.msra.mxu0 %v1447
  %1651 = vmatprep.subr.bf16.mxu0 %v1446
  %1652 = vmatpush1.bf16.msra.mxu0 %v1445
  %1653 = vmatprep.subr.bf16.mxu0 %v1444
  %1654 = vmatpush1.bf16.msra.mxu0 %v1443
  %1655 = vmatprep.subr.bf16.mxu0 %v1442
  %1656 = vmatpush1.bf16.msra.mxu0 %v1441
  %1657 = vmatprep.subr.bf16.mxu0 %v1440
  %1658 = vmatpush1.bf16.msra.mxu0 %v1439
  %1659 = vmatprep.subr.bf16.mxu0 %v1438
  %1660 = vmatpush1.bf16.msra.mxu0 %v1437
  %1661 = vmatprep.subr.bf16.mxu0 %v1436
  %1662 = vmatpush1.bf16.msra.mxu0 %v1435
  %1663 = vmatprep.subr.bf16.mxu0 0
  %1664 = vmatpush2.bf16.msra.mxu0 0
  %1665 = vmatprep.subr.bf16.mxu0 0
  %1666 = vmatpush2.bf16.msra.mxu0 0
  %1667 = vmatprep.subr.bf16.mxu0 %v1462
  %1668 = vmatpush2.bf16.msra.mxu0 %v1461
  %1669 = vmatprep.subr.bf16.mxu0 %v1460
  %1670 = vmatpush2.bf16.msra.mxu0 %v1459
  %1671 = vmatprep.subr.bf16.mxu0 %v1458
  %1672 = vmatpush2.bf16.msra.mxu0 %v1457
  %1673 = vmatprep.subr.bf16.mxu0 %v1456
  %1674 = vmatpush2.bf16.msra.mxu0 %v1455
  %1675 = vmatprep.subr.bf16.mxu0 %v1454
  %1676 = vmatpush2.bf16.msra.mxu0 %v1453
  %1677 = vmatprep.subr.bf16.mxu0 %v1452
  %1678 = vmatpush2.bf16.msra.mxu0 %v1451
  %1679 = vmatprep.mubr.bf16.mxu0 %v1524
  %1680 = vmatmul.mubr.bf16.gmra.mxu0 %v1176
  %v1681 = vpop.f32.mrf.mxu0
  %v1682 = vadd.f32 %v1579, %v1681
  %v1683 = vpop.f32.mrf.mxu0
  %v1684 = vadd.f32 %v1581, %v1683
  %v1685 = vpop.f32.mrf.mxu0
  %v1686 = vadd.f32 %v1583, %v1685
  %v1687 = vpop.f32.mrf.mxu0
  %v1688 = vadd.f32 %v1585, %v1687
  %1689 = vmatprep.mubr.bf16.mxu0 %v1527
  %1690 = vmatmul.mubr.bf16.gmra.mxu0 %v1180
  %v1691 = vpop.f32.mrf.mxu0
  %v1692 = vadd.f32 %v1589, %v1691
  %v1693 = vpop.f32.mrf.mxu0
  %v1694 = vadd.f32 %v1591, %v1693
  %v1695 = vpop.f32.mrf.mxu0
  %v1696 = vadd.f32 %v1593, %v1695
  %v1697 = vpop.f32.mrf.mxu0
  %v1698 = vadd.f32 %v1595, %v1697
  %1699 = vmatprep.mubr.bf16.mxu0 %v1530
  %1700 = vmatmul.mubr.bf16.gmra.mxu0 %v1184
  %v1701 = vpop.f32.mrf.mxu0
  %v1702 = vadd.f32 %v1599, %v1701
  %v1703 = vpop.f32.mrf.mxu0
  %v1704 = vadd.f32 %v1601, %v1703
  %v1705 = vpop.f32.mrf.mxu0
  %v1706 = vadd.f32 %v1603, %v1705
  %v1707 = vpop.f32.mrf.mxu0
  %v1708 = vadd.f32 %v1605, %v1707
  %1709 = vmatprep.mubr.bf16.mxu0 %v1533
  %1710 = vmatmul.mubr.bf16.gmra.mxu0 %v1188
  %v1711 = vpop.f32.mrf.mxu0
  %v1712 = vadd.f32 %v1609, %v1711
  %v1713 = vpop.f32.mrf.mxu0
  %v1714 = vadd.f32 %v1611, %v1713
  %v1715 = vpop.f32.mrf.mxu0
  %v1716 = vadd.f32 %v1613, %v1715
  %v1717 = vpop.f32.mrf.mxu0
  %v1718 = vadd.f32 %v1615, %v1717
  %1719 = vmatprep.mubr.bf16.mxu0 %v1536
  %1720 = vmatmul.mubr.bf16.gmra.mxu0 %v1192
  %v1721 = vpop.f32.mrf.mxu0
  %v1722 = vadd.f32 %v1619, %v1721
  %v1723 = vpop.f32.mrf.mxu0
  %v1724 = vadd.f32 %v1621, %v1723
  %v1725 = vpop.f32.mrf.mxu0
  %v1726 = vadd.f32 %v1623, %v1725
  %v1727 = vpop.f32.mrf.mxu0
  %v1728 = vadd.f32 %v1625, %v1727
  %1729 = vmatprep.mubr.bf16.mxu0 %v1539
  %1730 = vmatmul.mubr.bf16.gmra.mxu0 %v1196
  %v1731 = vpop.f32.mrf.mxu0
  %v1732 = vadd.f32 %v1629, %v1731
  %v1733 = vpop.f32.mrf.mxu0
  %v1734 = vadd.f32 %v1631, %v1733
  %v1735 = vpop.f32.mrf.mxu0
  %v1736 = vadd.f32 %v1633, %v1735
  %v1737 = vpop.f32.mrf.mxu0
  %v1738 = vadd.f32 %v1635, %v1737
  %1739 = vmatprep.mubr.bf16.mxu0 %v1542
  %1740 = vmatmul.mubr.bf16.gmra.mxu0 %v1200
  %v1741 = vpop.f32.mrf.mxu0
  %v1742 = vadd.f32 %v1639, %v1741
  %v1743 = vpop.f32.mrf.mxu0
  %v1744 = vadd.f32 %v1641, %v1743
  %v1745 = vpop.f32.mrf.mxu0
  %v1746 = vadd.f32 %v1643, %v1745
  %v1747 = vpop.f32.mrf.mxu0
  %v1748 = vadd.f32 %v1645, %v1747
  %1749 = vdwg.mxu0
  %1750 = vst [vmem:[%s7] sm:$0xff] %v1682
  %vm1751 = vcmask 556032
  %1752 = vst.msk [vmem:[%s7 + $0x8] sm:$0xff] %vm1751, %v1684
  %1753 = vst [vmem:[%s7 + $0x10] sm:$0xff] %v1686
  %1754 = vst.msk [vmem:[%s7 + $0x18] sm:$0xff] %vm1751, %v1688
  %1755 = vst [vmem:[%s7 + $0x20] sm:$0xff] %v1692
  %1756 = vst.msk [vmem:[%s7 + $0x28] sm:$0xff] %vm1751, %v1694
  %1757 = vst [vmem:[%s7 + $0x30] sm:$0xff] %v1696
  %1758 = vst.msk [vmem:[%s7 + $0x38] sm:$0xff] %vm1751, %v1698
  %1759 = vst [vmem:[%s7 + $0x40] sm:$0xff] %v1702
  %1760 = vst.msk [vmem:[%s7 + $0x48] sm:$0xff] %vm1751, %v1704
  %1761 = vst [vmem:[%s7 + $0x50] sm:$0xff] %v1706
  %1762 = vst.msk [vmem:[%s7 + $0x58] sm:$0xff] %vm1751, %v1708
  %1763 = vst [vmem:[%s7 + $0x60] sm:$0xff] %v1712
  %1764 = vst.msk [vmem:[%s7 + $0x68] sm:$0xff] %vm1751, %v1714
  %1765 = vst [vmem:[%s7 + $0x70] sm:$0xff] %v1716
  %1766 = vst.msk [vmem:[%s7 + $0x78] sm:$0xff] %vm1751, %v1718
  %1767 = vst [vmem:[%s7 + $0x80] sm:$0xff] %v1722
  %1768 = vst.msk [vmem:[%s7 + $0x88] sm:$0xff] %vm1751, %v1724
  %1769 = vst [vmem:[%s7 + $0x90] sm:$0xff] %v1726
  %1770 = vst.msk [vmem:[%s7 + $0x98] sm:$0xff] %vm1751, %v1728
  %1771 = vst [vmem:[%s7 + $0xa0] sm:$0xff] %v1732
  %1772 = vst.msk [vmem:[%s7 + $0xa8] sm:$0xff] %vm1751, %v1734
  %1773 = vst [vmem:[%s7 + $0xb0] sm:$0xff] %v1736
  %1774 = vst.msk [vmem:[%s7 + $0xb8] sm:$0xff] %vm1751, %v1738
  %1775 = vst [vmem:[%s7 + $0xc0] sm:$0xff] %v1742
  %1776 = vst.msk [vmem:[%s7 + $0xc8] sm:$0xff] %vm1751, %v1744
  %1777 = vst [vmem:[%s7 + $0xd0] sm:$0xff] %v1746
  %1778 = vst.msk [vmem:[%s7 + $0xd8] sm:$0xff] %vm1751, %v1748
  // Predicated region
  $region60: #{tpu_custom_call.1} parent=0 // pred_check
    _
  $region61: #{tpu_custom_call.1} parent=0 // pred_check_branch
    %1780 = sbr.rel (0) target = $region63
  $region62: #{tpu_custom_call.1} parent=0 // pred_region
    _
  $region63: #{tpu_custom_call.1} parent=0 // pred_fallthru
    _
  // Predicated region
  $region64: #{tpu_custom_call.1} parent=0 // pred_check
    _
  $region65: #{tpu_custom_call.1} parent=0 // pred_check_branch
    %1782 = sbr.rel (0) target = $region67
  $region66: #{tpu_custom_call.1} parent=0 // pred_region
    _
  $region67: #{tpu_custom_call.1} parent=0 // pred_fallthru
    _
  %1783 = vsyncmov [#allocation3]
  %s1784 = vpop.sfrf %1783
  %p1785 = scmp.eq.s32.totalorder %s1784, 0
  %p1786 = pneg %p1785
  %1788 = shalt.err (%p1786)

</llo_original>
